<compile_context>
chip_gen: v5e
topology: v5e:2x2
jax: 0.10.0
libtpu: 0.0.40
codegen_flags: <defaults>
</compile_context>

<pallas_src>
import functools

import jax
import jax.numpy as jnp
from jax.experimental import pallas as pl
from jax.experimental.pallas import tpu as pltpu

# Small stand-ins for the module's hyperparameters
VOCAB_SIZE = 64
EMBEDDING_DIM = 32       # module uses 300
MAX_SEQ_LEN = 8
HIDDEN_SIZE = 32         # module uses 128
NUM_CLASSES = 4
BATCH = 2


def mlp_kernel(ids_ref, emb_ref, w1_ref, b1_ref, w2_ref, b2_ref, out_ref, x_ref,
               *, tb, seq_len, emb_dim):
    # ids_ref: (B_pad, L) int32 in SMEM      emb_ref: (V, D) f32 in VMEM
    # w1_ref:  (L*D, H_pad) bf16             b1_ref:  (1, H_pad) f32
    # w2_ref:  (H_pad, C_pad) bf16           b2_ref:  (1, C_pad) f32
    # out_ref: (tb, C_pad) f32               x_ref:   (tb, L*D) f32 scratch
    i = pl.program_id(0)

    # --- fused embedding lookup + flatten: x[b, l*D:(l+1)*D] = emb[ids[row, l], :] ---
    for b in range(tb):                       # static unroll (tb, seq_len are small)
        row = i * tb + b
        for l in range(seq_len):
            tok = ids_ref[row, l]             # scalar read from SMEM
            x_ref[pl.ds(b, 1), pl.ds(l * emb_dim, emb_dim)] = emb_ref[pl.ds(tok, 1), :]

    # --- fc1 -> sigmoid: bf16 MXU inputs, f32 accumulate, f32 elementwise (v5e-safe) ---
    x = x_ref[...].astype(jnp.bfloat16)
    h = jnp.dot(x, w1_ref[...], preferred_element_type=jnp.float32) + b1_ref[...]
    h = jax.nn.sigmoid(h)                     # ACTIVATION = nn.Sigmoid()

    # dropout(p=0.5) in eval/inference mode == identity
    # TODO(synk): training-mode dropout (pltpu.prng_seed + stateful_bernoulli) not implemented.

    # --- fc2 ---
    preds = jnp.dot(h.astype(jnp.bfloat16), w2_ref[...],
                    preferred_element_type=jnp.float32) + b2_ref[...]
    out_ref[...] = preds.astype(out_ref.dtype)


def mlp_forward(text_ids, embedding, w1, b1, w2, b2):
    B, L = text_ids.shape
    V, D = embedding.shape
    in_dim, H = w1.shape
    C = w2.shape[1]
    assert in_dim == L * D

    def rup(n, m):
        return -(-n // m) * m

    # lane/sublane-dense padding (avoid masked loads/stores and wasted vreg lanes)
    B_pad = rup(B, 8)
    H_pad = rup(H, 128)
    C_pad = rup(C, 128)

    ids = jnp.zeros((B_pad, L), jnp.int32).at[:B, :].set(text_ids.astype(jnp.int32))

    # bf16 weights for the MXU; biases stay f32 (elementwise path stays f32)
    w1_p = jnp.zeros((in_dim, H_pad), jnp.bfloat16).at[:, :H].set(w1.astype(jnp.bfloat16))
    b1_p = jnp.zeros((1, H_pad), jnp.float32).at[:, :H].set(b1.reshape(1, H))
    w2_p = jnp.zeros((H_pad, C_pad), jnp.bfloat16).at[:H, :C].set(w2.astype(jnp.bfloat16))
    b2_p = jnp.zeros((1, C_pad), jnp.float32).at[:, :C].set(b2.reshape(1, C))

    TB = 8                                     # batch tile = one sublane group
    grid = (B_pad // TB,)

    out = pl.pallas_call(
        functools.partial(mlp_kernel, tb=TB, seq_len=L, emb_dim=D),
        out_shape=jax.ShapeDtypeStruct((B_pad, C_pad), jnp.float32),
        grid=grid,
        in_specs=[
            pl.BlockSpec(memory_space=pltpu.MemorySpace.SMEM),   # token ids (whole array, SMEM)
            pl.BlockSpec((V, D), lambda i: (0, 0)),              # embedding table, VMEM-resident
            pl.BlockSpec((in_dim, H_pad), lambda i: (0, 0)),     # w1, VMEM-resident
            pl.BlockSpec((1, H_pad), lambda i: (0, 0)),          # b1
            pl.BlockSpec((H_pad, C_pad), lambda i: (0, 0)),      # w2
            pl.BlockSpec((1, C_pad), lambda i: (0, 0)),          # b2
        ],
        out_specs=pl.BlockSpec((TB, C_pad), lambda i: (i, 0)),   # lane-dense output block
        scratch_shapes=[pltpu.VMEM((TB, in_dim), jnp.float32)],  # gathered/flattened x tile
        compiler_params=pltpu.CompilerParams(
            dimension_semantics=("parallel",)),                  # batch tiles -> v7x megacore
    )(ids, embedding, w1_p, b1_p, w2_p, b2_p)

    return out[:B, :C]


def make_params(key):
    k_emb, k_w1, k_b1, k_w2, k_b2 = jax.random.split(key, 5)
    in_dim = EMBEDDING_DIM * MAX_SEQ_LEN
    # deterministic synthetic init (glove matrix stand-in is a small random normal)
    embedding = 0.01 * jax.random.normal(k_emb, (VOCAB_SIZE, EMBEDDING_DIM), jnp.float32)
    # nn.Linear-style uniform init, stored transposed as (in, out)
    lim1 = 1.0 / jnp.sqrt(in_dim)
    w1 = jax.random.uniform(k_w1, (in_dim, HIDDEN_SIZE), jnp.float32, -lim1, lim1)
    b1 = jax.random.uniform(k_b1, (HIDDEN_SIZE,), jnp.float32, -lim1, lim1)
    lim2 = 1.0 / jnp.sqrt(HIDDEN_SIZE)
    w2 = jax.random.uniform(k_w2, (HIDDEN_SIZE, NUM_CLASSES), jnp.float32, -lim2, lim2)
    b2 = jax.random.uniform(k_b2, (NUM_CLASSES,), jnp.float32, -lim2, lim2)
    return embedding, w1, b1, w2, b2


if __name__ == "__main__":
    key = jax.random.PRNGKey(0)
    k_params, k_text = jax.random.split(key)
    embedding, w1, b1, w2, b2 = make_params(k_params)

    text = jax.random.randint(k_text, (BATCH, MAX_SEQ_LEN), 0, VOCAB_SIZE, jnp.int32)

    preds = mlp_forward(text, embedding, w1, b1, w2, b2)
    jax.block_until_ready(preds)

    # pure-JAX reference with matching numerics (bf16 MXU operands, f32 accumulate)
    x_ref = jnp.take(embedding, text, axis=0).reshape(BATCH, -1)
    h_ref = jax.nn.sigmoid(
        jnp.dot(x_ref.astype(jnp.bfloat16), w1.astype(jnp.bfloat16),
                preferred_element_type=jnp.float32) + b1)
    ref = jnp.dot(h_ref.astype(jnp.bfloat16), w2.astype(jnp.bfloat16),
                  preferred_element_type=jnp.float32) + b2

    assert preds.shape == (BATCH, NUM_CLASSES)
    assert jnp.allclose(preds, ref, atol=1e-3, rtol=1e-3)

    print("KERNEL_OK")
</pallas_src>

<mosaic_0001>
module attributes {stable_mosaic.version = 11 : i64} {
  func.func @mlp_kernel(%arg0: i32, %arg1: memref<8x8xi32, #tpu.memory_space<smem>>, %arg2: memref<64x32xf32, #tpu.memory_space<vmem>>, %arg3: memref<256x128xbf16, #tpu.memory_space<vmem>>, %arg4: memref<1x128xf32, #tpu.memory_space<vmem>>, %arg5: memref<128x128xbf16, #tpu.memory_space<vmem>>, %arg6: memref<1x128xf32, #tpu.memory_space<vmem>>, %arg7: memref<8x128xf32, #tpu.memory_space<vmem>>, %arg8: memref<8x256xf32, #tpu.memory_space<vmem>>) attributes {dimension_semantics = [#tpu.dimension_semantics<parallel>], iteration_bounds = array<i64: 1>, scalar_prefetch = 0 : i64, scratch_operands = 1 : i64, tpu.core_type = #tpu.core_type<tc>, window_params = [{transform_indices = @transform_0, window_bounds = array<i64: 8, 8>}, {pipeline_mode = #tpu.pipeline_mode<synchronous>, transform_indices = @transform_1, window_bounds = array<i64: 64, 32>}, {pipeline_mode = #tpu.pipeline_mode<synchronous>, transform_indices = @transform_2, window_bounds = array<i64: 256, 128>}, {pipeline_mode = #tpu.pipeline_mode<synchronous>, transform_indices = @transform_3, window_bounds = array<i64: 1, 128>}, {pipeline_mode = #tpu.pipeline_mode<synchronous>, transform_indices = @transform_4, window_bounds = array<i64: 128, 128>}, {pipeline_mode = #tpu.pipeline_mode<synchronous>, transform_indices = @transform_5, window_bounds = array<i64: 1, 128>}, {transform_indices = @transform_6, window_bounds = array<i64: 8, 128>}]} {
    %c8_i32 = arith.constant 8 : i32
    %0 = arith.muli %arg0, %c8_i32 : i32
    %c0_i32 = arith.constant 0 : i32
    %1 = arith.addi %0, %c0_i32 : i32
    %2 = arith.index_cast %1 : i32 to index
    %c0 = arith.constant 0 : index
    %3 = memref.load %arg1[%2, %c0] : memref<8x8xi32, #tpu.memory_space<smem>>
    %4 = arith.index_cast %3 : i32 to index
    %c0_0 = arith.constant 0 : index
    %5 = vector.load %arg2[%4, %c0_0] : memref<64x32xf32, #tpu.memory_space<vmem>>, vector<1x32xf32>
    %c0_1 = arith.constant 0 : index
    %c0_2 = arith.constant 0 : index
    %6 = vector.load %arg8[%c0_1, %c0_2] : memref<8x256xf32, #tpu.memory_space<vmem>>, vector<1x32xf32>
    tpu.vector_store %arg8[%c0_1, %c0_2], %5 {strides = array<i32>} : memref<8x256xf32, #tpu.memory_space<vmem>>, vector<1x32xf32>,
    %7 = arith.index_cast %1 : i32 to index
    %c1 = arith.constant 1 : index
    %8 = memref.load %arg1[%7, %c1] : memref<8x8xi32, #tpu.memory_space<smem>>
    %9 = arith.index_cast %8 : i32 to index
    %c0_3 = arith.constant 0 : index
    %10 = vector.load %arg2[%9, %c0_3] : memref<64x32xf32, #tpu.memory_space<vmem>>, vector<1x32xf32>
    %c0_4 = arith.constant 0 : index
    %c32 = arith.constant 32 : index
    %11 = vector.load %arg8[%c0_4, %c32] : memref<8x256xf32, #tpu.memory_space<vmem>>, vector<1x32xf32>
    tpu.vector_store %arg8[%c0_4, %c32], %10 {strides = array<i32>} : memref<8x256xf32, #tpu.memory_space<vmem>>, vector<1x32xf32>,
    %12 = arith.index_cast %1 : i32 to index
    %c2 = arith.constant 2 : index
    %13 = memref.load %arg1[%12, %c2] : memref<8x8xi32, #tpu.memory_space<smem>>
    %14 = arith.index_cast %13 : i32 to index
    %c0_5 = arith.constant 0 : index
    %15 = vector.load %arg2[%14, %c0_5] : memref<64x32xf32, #tpu.memory_space<vmem>>, vector<1x32xf32>
    %c0_6 = arith.constant 0 : index
    %c64 = arith.constant 64 : index
    %16 = vector.load %arg8[%c0_6, %c64] : memref<8x256xf32, #tpu.memory_space<vmem>>, vector<1x32xf32>
    tpu.vector_store %arg8[%c0_6, %c64], %15 {strides = array<i32>} : memref<8x256xf32, #tpu.memory_space<vmem>>, vector<1x32xf32>,
    %17 = arith.index_cast %1 : i32 to index
    %c3 = arith.constant 3 : index
    %18 = memref.load %arg1[%17, %c3] : memref<8x8xi32, #tpu.memory_space<smem>>
    %19 = arith.index_cast %18 : i32 to index
    %c0_7 = arith.constant 0 : index
    %20 = vector.load %arg2[%19, %c0_7] : memref<64x32xf32, #tpu.memory_space<vmem>>, vector<1x32xf32>
    %c0_8 = arith.constant 0 : index
    %c96 = arith.constant 96 : index
    %21 = vector.load %arg8[%c0_8, %c96] : memref<8x256xf32, #tpu.memory_space<vmem>>, vector<1x32xf32>
    tpu.vector_store %arg8[%c0_8, %c96], %20 {strides = array<i32>} : memref<8x256xf32, #tpu.memory_space<vmem>>, vector<1x32xf32>,
    %22 = arith.index_cast %1 : i32 to index
    %c4 = arith.constant 4 : index
    %23 = memref.load %arg1[%22, %c4] : memref<8x8xi32, #tpu.memory_space<smem>>
    %24 = arith.index_cast %23 : i32 to index
    %c0_9 = arith.constant 0 : index
    %25 = vector.load %arg2[%24, %c0_9] : memref<64x32xf32, #tpu.memory_space<vmem>>, vector<1x32xf32>
    %c0_10 = arith.constant 0 : index
    %c128 = arith.constant 128 : index
    %26 = vector.load %arg8[%c0_10, %c128] : memref<8x256xf32, #tpu.memory_space<vmem>>, vector<1x32xf32>
    tpu.vector_store %arg8[%c0_10, %c128], %25 {strides = array<i32>} : memref<8x256xf32, #tpu.memory_space<vmem>>, vector<1x32xf32>,
    %27 = arith.index_cast %1 : i32 to index
    %c5 = arith.constant 5 : index
    %28 = memref.load %arg1[%27, %c5] : memref<8x8xi32, #tpu.memory_space<smem>>
    %29 = arith.index_cast %28 : i32 to index
    %c0_11 = arith.constant 0 : index
    %30 = vector.load %arg2[%29, %c0_11] : memref<64x32xf32, #tpu.memory_space<vmem>>, vector<1x32xf32>
    %c0_12 = arith.constant 0 : index
    %c160 = arith.constant 160 : index
    %31 = vector.load %arg8[%c0_12, %c160] : memref<8x256xf32, #tpu.memory_space<vmem>>, vector<1x32xf32>
    tpu.vector_store %arg8[%c0_12, %c160], %30 {strides = array<i32>} : memref<8x256xf32, #tpu.memory_space<vmem>>, vector<1x32xf32>,
    %32 = arith.index_cast %1 : i32 to index
    %c6 = arith.constant 6 : index
    %33 = memref.load %arg1[%32, %c6] : memref<8x8xi32, #tpu.memory_space<smem>>
    %34 = arith.index_cast %33 : i32 to index
    %c0_13 = arith.constant 0 : index
    %35 = vector.load %arg2[%34, %c0_13] : memref<64x32xf32, #tpu.memory_space<vmem>>, vector<1x32xf32>
    %c0_14 = arith.constant 0 : index
    %c192 = arith.constant 192 : index
    %36 = vector.load %arg8[%c0_14, %c192] : memref<8x256xf32, #tpu.memory_space<vmem>>, vector<1x32xf32>
    tpu.vector_store %arg8[%c0_14, %c192], %35 {strides = array<i32>} : memref<8x256xf32, #tpu.memory_space<vmem>>, vector<1x32xf32>,
    %37 = arith.index_cast %1 : i32 to index
    %c7 = arith.constant 7 : index
    %38 = memref.load %arg1[%37, %c7] : memref<8x8xi32, #tpu.memory_space<smem>>
    %39 = arith.index_cast %38 : i32 to index
    %c0_15 = arith.constant 0 : index
    %40 = vector.load %arg2[%39, %c0_15] : memref<64x32xf32, #tpu.memory_space<vmem>>, vector<1x32xf32>
    %c0_16 = arith.constant 0 : index
    %c224 = arith.constant 224 : index
    %41 = vector.load %arg8[%c0_16, %c224] : memref<8x256xf32, #tpu.memory_space<vmem>>, vector<1x32xf32>
    tpu.vector_store %arg8[%c0_16, %c224], %40 {strides = array<i32>} : memref<8x256xf32, #tpu.memory_space<vmem>>, vector<1x32xf32>,
    %c8_i32_17 = arith.constant 8 : i32
    %42 = arith.muli %arg0, %c8_i32_17 : i32
    %c1_i32 = arith.constant 1 : i32
    %43 = arith.addi %42, %c1_i32 : i32
    %44 = arith.index_cast %43 : i32 to index
    %c0_18 = arith.constant 0 : index
    %45 = memref.load %arg1[%44, %c0_18] : memref<8x8xi32, #tpu.memory_space<smem>>
    %46 = arith.index_cast %45 : i32 to index
    %c0_19 = arith.constant 0 : index
    %47 = vector.load %arg2[%46, %c0_19] : memref<64x32xf32, #tpu.memory_space<vmem>>, vector<1x32xf32>
    %c1_20 = arith.constant 1 : index
    %c0_21 = arith.constant 0 : index
    %48 = vector.load %arg8[%c1_20, %c0_21] : memref<8x256xf32, #tpu.memory_space<vmem>>, vector<1x32xf32>
    tpu.vector_store %arg8[%c1_20, %c0_21], %47 {strides = array<i32>} : memref<8x256xf32, #tpu.memory_space<vmem>>, vector<1x32xf32>,
    %49 = arith.index_cast %43 : i32 to index
    %c1_22 = arith.constant 1 : index
    %50 = memref.load %arg1[%49, %c1_22] : memref<8x8xi32, #tpu.memory_space<smem>>
    %51 = arith.index_cast %50 : i32 to index
    %c0_23 = arith.constant 0 : index
    %52 = vector.load %arg2[%51, %c0_23] : memref<64x32xf32, #tpu.memory_space<vmem>>, vector<1x32xf32>
    %c1_24 = arith.constant 1 : index
    %c32_25 = arith.constant 32 : index
    %53 = vector.load %arg8[%c1_24, %c32_25] : memref<8x256xf32, #tpu.memory_space<vmem>>, vector<1x32xf32>
    tpu.vector_store %arg8[%c1_24, %c32_25], %52 {strides = array<i32>} : memref<8x256xf32, #tpu.memory_space<vmem>>, vector<1x32xf32>,
    %54 = arith.index_cast %43 : i32 to index
    %c2_26 = arith.constant 2 : index
    %55 = memref.load %arg1[%54, %c2_26] : memref<8x8xi32, #tpu.memory_space<smem>>
    %56 = arith.index_cast %55 : i32 to index
    %c0_27 = arith.constant 0 : index
    %57 = vector.load %arg2[%56, %c0_27] : memref<64x32xf32, #tpu.memory_space<vmem>>, vector<1x32xf32>
    %c1_28 = arith.constant 1 : index
    %c64_29 = arith.constant 64 : index
    %58 = vector.load %arg8[%c1_28, %c64_29] : memref<8x256xf32, #tpu.memory_space<vmem>>, vector<1x32xf32>
    tpu.vector_store %arg8[%c1_28, %c64_29], %57 {strides = array<i32>} : memref<8x256xf32, #tpu.memory_space<vmem>>, vector<1x32xf32>,
    %59 = arith.index_cast %43 : i32 to index
    %c3_30 = arith.constant 3 : index
    %60 = memref.load %arg1[%59, %c3_30] : memref<8x8xi32, #tpu.memory_space<smem>>
    %61 = arith.index_cast %60 : i32 to index
    %c0_31 = arith.constant 0 : index
    %62 = vector.load %arg2[%61, %c0_31] : memref<64x32xf32, #tpu.memory_space<vmem>>, vector<1x32xf32>
    %c1_32 = arith.constant 1 : index
    %c96_33 = arith.constant 96 : index
    %63 = vector.load %arg8[%c1_32, %c96_33] : memref<8x256xf32, #tpu.memory_space<vmem>>, vector<1x32xf32>
    tpu.vector_store %arg8[%c1_32, %c96_33], %62 {strides = array<i32>} : memref<8x256xf32, #tpu.memory_space<vmem>>, vector<1x32xf32>,
    %64 = arith.index_cast %43 : i32 to index
    %c4_34 = arith.constant 4 : index
    %65 = memref.load %arg1[%64, %c4_34] : memref<8x8xi32, #tpu.memory_space<smem>>
    %66 = arith.index_cast %65 : i32 to index
    %c0_35 = arith.constant 0 : index
    %67 = vector.load %arg2[%66, %c0_35] : memref<64x32xf32, #tpu.memory_space<vmem>>, vector<1x32xf32>
    %c1_36 = arith.constant 1 : index
    %c128_37 = arith.constant 128 : index
    %68 = vector.load %arg8[%c1_36, %c128_37] : memref<8x256xf32, #tpu.memory_space<vmem>>, vector<1x32xf32>
    tpu.vector_store %arg8[%c1_36, %c128_37], %67 {strides = array<i32>} : memref<8x256xf32, #tpu.memory_space<vmem>>, vector<1x32xf32>,
    %69 = arith.index_cast %43 : i32 to index
    %c5_38 = arith.constant 5 : index
    %70 = memref.load %arg1[%69, %c5_38] : memref<8x8xi32, #tpu.memory_space<smem>>
    %71 = arith.index_cast %70 : i32 to index
    %c0_39 = arith.constant 0 : index
    %72 = vector.load %arg2[%71, %c0_39] : memref<64x32xf32, #tpu.memory_space<vmem>>, vector<1x32xf32>
    %c1_40 = arith.constant 1 : index
    %c160_41 = arith.constant 160 : index
    %73 = vector.load %arg8[%c1_40, %c160_41] : memref<8x256xf32, #tpu.memory_space<vmem>>, vector<1x32xf32>
    tpu.vector_store %arg8[%c1_40, %c160_41], %72 {strides = array<i32>} : memref<8x256xf32, #tpu.memory_space<vmem>>, vector<1x32xf32>,
    %74 = arith.index_cast %43 : i32 to index
    %c6_42 = arith.constant 6 : index
    %75 = memref.load %arg1[%74, %c6_42] : memref<8x8xi32, #tpu.memory_space<smem>>
    %76 = arith.index_cast %75 : i32 to index
    %c0_43 = arith.constant 0 : index
    %77 = vector.load %arg2[%76, %c0_43] : memref<64x32xf32, #tpu.memory_space<vmem>>, vector<1x32xf32>
    %c1_44 = arith.constant 1 : index
    %c192_45 = arith.constant 192 : index
    %78 = vector.load %arg8[%c1_44, %c192_45] : memref<8x256xf32, #tpu.memory_space<vmem>>, vector<1x32xf32>
    tpu.vector_store %arg8[%c1_44, %c192_45], %77 {strides = array<i32>} : memref<8x256xf32, #tpu.memory_space<vmem>>, vector<1x32xf32>,
    %79 = arith.index_cast %43 : i32 to index
    %c7_46 = arith.constant 7 : index
    %80 = memref.load %arg1[%79, %c7_46] : memref<8x8xi32, #tpu.memory_space<smem>>
    %81 = arith.index_cast %80 : i32 to index
    %c0_47 = arith.constant 0 : index
    %82 = vector.load %arg2[%81, %c0_47] : memref<64x32xf32, #tpu.memory_space<vmem>>, vector<1x32xf32>
    %c1_48 = arith.constant 1 : index
    %c224_49 = arith.constant 224 : index
    %83 = vector.load %arg8[%c1_48, %c224_49] : memref<8x256xf32, #tpu.memory_space<vmem>>, vector<1x32xf32>
    tpu.vector_store %arg8[%c1_48, %c224_49], %82 {strides = array<i32>} : memref<8x256xf32, #tpu.memory_space<vmem>>, vector<1x32xf32>,
    %c8_i32_50 = arith.constant 8 : i32
    %84 = arith.muli %arg0, %c8_i32_50 : i32
    %c2_i32 = arith.constant 2 : i32
    %85 = arith.addi %84, %c2_i32 : i32
    %86 = arith.index_cast %85 : i32 to index
    %c0_51 = arith.constant 0 : index
    %87 = memref.load %arg1[%86, %c0_51] : memref<8x8xi32, #tpu.memory_space<smem>>
    %88 = arith.index_cast %87 : i32 to index
    %c0_52 = arith.constant 0 : index
    %89 = vector.load %arg2[%88, %c0_52] : memref<64x32xf32, #tpu.memory_space<vmem>>, vector<1x32xf32>
    %c2_53 = arith.constant 2 : index
    %c0_54 = arith.constant 0 : index
    %90 = vector.load %arg8[%c2_53, %c0_54] : memref<8x256xf32, #tpu.memory_space<vmem>>, vector<1x32xf32>
    tpu.vector_store %arg8[%c2_53, %c0_54], %89 {strides = array<i32>} : memref<8x256xf32, #tpu.memory_space<vmem>>, vector<1x32xf32>,
    %91 = arith.index_cast %85 : i32 to index
    %c1_55 = arith.constant 1 : index
    %92 = memref.load %arg1[%91, %c1_55] : memref<8x8xi32, #tpu.memory_space<smem>>
    %93 = arith.index_cast %92 : i32 to index
    %c0_56 = arith.constant 0 : index
    %94 = vector.load %arg2[%93, %c0_56] : memref<64x32xf32, #tpu.memory_space<vmem>>, vector<1x32xf32>
    %c2_57 = arith.constant 2 : index
    %c32_58 = arith.constant 32 : index
    %95 = vector.load %arg8[%c2_57, %c32_58] : memref<8x256xf32, #tpu.memory_space<vmem>>, vector<1x32xf32>
    tpu.vector_store %arg8[%c2_57, %c32_58], %94 {strides = array<i32>} : memref<8x256xf32, #tpu.memory_space<vmem>>, vector<1x32xf32>,
    %96 = arith.index_cast %85 : i32 to index
    %c2_59 = arith.constant 2 : index
    %97 = memref.load %arg1[%96, %c2_59] : memref<8x8xi32, #tpu.memory_space<smem>>
    %98 = arith.index_cast %97 : i32 to index
    %c0_60 = arith.constant 0 : index
    %99 = vector.load %arg2[%98, %c0_60] : memref<64x32xf32, #tpu.memory_space<vmem>>, vector<1x32xf32>
    %c2_61 = arith.constant 2 : index
    %c64_62 = arith.constant 64 : index
    %100 = vector.load %arg8[%c2_61, %c64_62] : memref<8x256xf32, #tpu.memory_space<vmem>>, vector<1x32xf32>
    tpu.vector_store %arg8[%c2_61, %c64_62], %99 {strides = array<i32>} : memref<8x256xf32, #tpu.memory_space<vmem>>, vector<1x32xf32>,
    %101 = arith.index_cast %85 : i32 to index
    %c3_63 = arith.constant 3 : index
    %102 = memref.load %arg1[%101, %c3_63] : memref<8x8xi32, #tpu.memory_space<smem>>
    %103 = arith.index_cast %102 : i32 to index
    %c0_64 = arith.constant 0 : index
    %104 = vector.load %arg2[%103, %c0_64] : memref<64x32xf32, #tpu.memory_space<vmem>>, vector<1x32xf32>
    %c2_65 = arith.constant 2 : index
    %c96_66 = arith.constant 96 : index
    %105 = vector.load %arg8[%c2_65, %c96_66] : memref<8x256xf32, #tpu.memory_space<vmem>>, vector<1x32xf32>
    tpu.vector_store %arg8[%c2_65, %c96_66], %104 {strides = array<i32>} : memref<8x256xf32, #tpu.memory_space<vmem>>, vector<1x32xf32>,
    %106 = arith.index_cast %85 : i32 to index
    %c4_67 = arith.constant 4 : index
    %107 = memref.load %arg1[%106, %c4_67] : memref<8x8xi32, #tpu.memory_space<smem>>
    %108 = arith.index_cast %107 : i32 to index
    %c0_68 = arith.constant 0 : index
    %109 = vector.load %arg2[%108, %c0_68] : memref<64x32xf32, #tpu.memory_space<vmem>>, vector<1x32xf32>
    %c2_69 = arith.constant 2 : index
    %c128_70 = arith.constant 128 : index
    %110 = vector.load %arg8[%c2_69, %c128_70] : memref<8x256xf32, #tpu.memory_space<vmem>>, vector<1x32xf32>
    tpu.vector_store %arg8[%c2_69, %c128_70], %109 {strides = array<i32>} : memref<8x256xf32, #tpu.memory_space<vmem>>, vector<1x32xf32>,
    %111 = arith.index_cast %85 : i32 to index
    %c5_71 = arith.constant 5 : index
    %112 = memref.load %arg1[%111, %c5_71] : memref<8x8xi32, #tpu.memory_space<smem>>
    %113 = arith.index_cast %112 : i32 to index
    %c0_72 = arith.constant 0 : index
    %114 = vector.load %arg2[%113, %c0_72] : memref<64x32xf32, #tpu.memory_space<vmem>>, vector<1x32xf32>
    %c2_73 = arith.constant 2 : index
    %c160_74 = arith.constant 160 : index
    %115 = vector.load %arg8[%c2_73, %c160_74] : memref<8x256xf32, #tpu.memory_space<vmem>>, vector<1x32xf32>
    tpu.vector_store %arg8[%c2_73, %c160_74], %114 {strides = array<i32>} : memref<8x256xf32, #tpu.memory_space<vmem>>, vector<1x32xf32>,
    %116 = arith.index_cast %85 : i32 to index
    %c6_75 = arith.constant 6 : index
    %117 = memref.load %arg1[%116, %c6_75] : memref<8x8xi32, #tpu.memory_space<smem>>
    %118 = arith.index_cast %117 : i32 to index
    %c0_76 = arith.constant 0 : index
    %119 = vector.load %arg2[%118, %c0_76] : memref<64x32xf32, #tpu.memory_space<vmem>>, vector<1x32xf32>
    %c2_77 = arith.constant 2 : index
    %c192_78 = arith.constant 192 : index
    %120 = vector.load %arg8[%c2_77, %c192_78] : memref<8x256xf32, #tpu.memory_space<vmem>>, vector<1x32xf32>
    tpu.vector_store %arg8[%c2_77, %c192_78], %119 {strides = array<i32>} : memref<8x256xf32, #tpu.memory_space<vmem>>, vector<1x32xf32>,
    %121 = arith.index_cast %85 : i32 to index
    %c7_79 = arith.constant 7 : index
    %122 = memref.load %arg1[%121, %c7_79] : memref<8x8xi32, #tpu.memory_space<smem>>
    %123 = arith.index_cast %122 : i32 to index
    %c0_80 = arith.constant 0 : index
    %124 = vector.load %arg2[%123, %c0_80] : memref<64x32xf32, #tpu.memory_space<vmem>>, vector<1x32xf32>
    %c2_81 = arith.constant 2 : index
    %c224_82 = arith.constant 224 : index
    %125 = vector.load %arg8[%c2_81, %c224_82] : memref<8x256xf32, #tpu.memory_space<vmem>>, vector<1x32xf32>
    tpu.vector_store %arg8[%c2_81, %c224_82], %124 {strides = array<i32>} : memref<8x256xf32, #tpu.memory_space<vmem>>, vector<1x32xf32>,
    %c8_i32_83 = arith.constant 8 : i32
    %126 = arith.muli %arg0, %c8_i32_83 : i32
    %c3_i32 = arith.constant 3 : i32
    %127 = arith.addi %126, %c3_i32 : i32
    %128 = arith.index_cast %127 : i32 to index
    %c0_84 = arith.constant 0 : index
    %129 = memref.load %arg1[%128, %c0_84] : memref<8x8xi32, #tpu.memory_space<smem>>
    %130 = arith.index_cast %129 : i32 to index
    %c0_85 = arith.constant 0 : index
    %131 = vector.load %arg2[%130, %c0_85] : memref<64x32xf32, #tpu.memory_space<vmem>>, vector<1x32xf32>
    %c3_86 = arith.constant 3 : index
    %c0_87 = arith.constant 0 : index
    %132 = vector.load %arg8[%c3_86, %c0_87] : memref<8x256xf32, #tpu.memory_space<vmem>>, vector<1x32xf32>
    tpu.vector_store %arg8[%c3_86, %c0_87], %131 {strides = array<i32>} : memref<8x256xf32, #tpu.memory_space<vmem>>, vector<1x32xf32>,
    %133 = arith.index_cast %127 : i32 to index
    %c1_88 = arith.constant 1 : index
    %134 = memref.load %arg1[%133, %c1_88] : memref<8x8xi32, #tpu.memory_space<smem>>
    %135 = arith.index_cast %134 : i32 to index
    %c0_89 = arith.constant 0 : index
    %136 = vector.load %arg2[%135, %c0_89] : memref<64x32xf32, #tpu.memory_space<vmem>>, vector<1x32xf32>
    %c3_90 = arith.constant 3 : index
    %c32_91 = arith.constant 32 : index
    %137 = vector.load %arg8[%c3_90, %c32_91] : memref<8x256xf32, #tpu.memory_space<vmem>>, vector<1x32xf32>
    tpu.vector_store %arg8[%c3_90, %c32_91], %136 {strides = array<i32>} : memref<8x256xf32, #tpu.memory_space<vmem>>, vector<1x32xf32>,
    %138 = arith.index_cast %127 : i32 to index
    %c2_92 = arith.constant 2 : index
    %139 = memref.load %arg1[%138, %c2_92] : memref<8x8xi32, #tpu.memory_space<smem>>
    %140 = arith.index_cast %139 : i32 to index
    %c0_93 = arith.constant 0 : index
    %141 = vector.load %arg2[%140, %c0_93] : memref<64x32xf32, #tpu.memory_space<vmem>>, vector<1x32xf32>
    %c3_94 = arith.constant 3 : index
    %c64_95 = arith.constant 64 : index
    %142 = vector.load %arg8[%c3_94, %c64_95] : memref<8x256xf32, #tpu.memory_space<vmem>>, vector<1x32xf32>
    tpu.vector_store %arg8[%c3_94, %c64_95], %141 {strides = array<i32>} : memref<8x256xf32, #tpu.memory_space<vmem>>, vector<1x32xf32>,
    %143 = arith.index_cast %127 : i32 to index
    %c3_96 = arith.constant 3 : index
    %144 = memref.load %arg1[%143, %c3_96] : memref<8x8xi32, #tpu.memory_space<smem>>
    %145 = arith.index_cast %144 : i32 to index
    %c0_97 = arith.constant 0 : index
    %146 = vector.load %arg2[%145, %c0_97] : memref<64x32xf32, #tpu.memory_space<vmem>>, vector<1x32xf32>
    %c3_98 = arith.constant 3 : index
    %c96_99 = arith.constant 96 : index
    %147 = vector.load %arg8[%c3_98, %c96_99] : memref<8x256xf32, #tpu.memory_space<vmem>>, vector<1x32xf32>
    tpu.vector_store %arg8[%c3_98, %c96_99], %146 {strides = array<i32>} : memref<8x256xf32, #tpu.memory_space<vmem>>, vector<1x32xf32>,
    %148 = arith.index_cast %127 : i32 to index
    %c4_100 = arith.constant 4 : index
    %149 = memref.load %arg1[%148, %c4_100] : memref<8x8xi32, #tpu.memory_space<smem>>
    %150 = arith.index_cast %149 : i32 to index
    %c0_101 = arith.constant 0 : index
    %151 = vector.load %arg2[%150, %c0_101] : memref<64x32xf32, #tpu.memory_space<vmem>>, vector<1x32xf32>
    %c3_102 = arith.constant 3 : index
    %c128_103 = arith.constant 128 : index
    %152 = vector.load %arg8[%c3_102, %c128_103] : memref<8x256xf32, #tpu.memory_space<vmem>>, vector<1x32xf32>
    tpu.vector_store %arg8[%c3_102, %c128_103], %151 {strides = array<i32>} : memref<8x256xf32, #tpu.memory_space<vmem>>, vector<1x32xf32>,
    %153 = arith.index_cast %127 : i32 to index
    %c5_104 = arith.constant 5 : index
    %154 = memref.load %arg1[%153, %c5_104] : memref<8x8xi32, #tpu.memory_space<smem>>
    %155 = arith.index_cast %154 : i32 to index
    %c0_105 = arith.constant 0 : index
    %156 = vector.load %arg2[%155, %c0_105] : memref<64x32xf32, #tpu.memory_space<vmem>>, vector<1x32xf32>
    %c3_106 = arith.constant 3 : index
    %c160_107 = arith.constant 160 : index
    %157 = vector.load %arg8[%c3_106, %c160_107] : memref<8x256xf32, #tpu.memory_space<vmem>>, vector<1x32xf32>
    tpu.vector_store %arg8[%c3_106, %c160_107], %156 {strides = array<i32>} : memref<8x256xf32, #tpu.memory_space<vmem>>, vector<1x32xf32>,
    %158 = arith.index_cast %127 : i32 to index
    %c6_108 = arith.constant 6 : index
    %159 = memref.load %arg1[%158, %c6_108] : memref<8x8xi32, #tpu.memory_space<smem>>
    %160 = arith.index_cast %159 : i32 to index
    %c0_109 = arith.constant 0 : index
    %161 = vector.load %arg2[%160, %c0_109] : memref<64x32xf32, #tpu.memory_space<vmem>>, vector<1x32xf32>
    %c3_110 = arith.constant 3 : index
    %c192_111 = arith.constant 192 : index
    %162 = vector.load %arg8[%c3_110, %c192_111] : memref<8x256xf32, #tpu.memory_space<vmem>>, vector<1x32xf32>
    tpu.vector_store %arg8[%c3_110, %c192_111], %161 {strides = array<i32>} : memref<8x256xf32, #tpu.memory_space<vmem>>, vector<1x32xf32>,
    %163 = arith.index_cast %127 : i32 to index
    %c7_112 = arith.constant 7 : index
    %164 = memref.load %arg1[%163, %c7_112] : memref<8x8xi32, #tpu.memory_space<smem>>
    %165 = arith.index_cast %164 : i32 to index
    %c0_113 = arith.constant 0 : index
    %166 = vector.load %arg2[%165, %c0_113] : memref<64x32xf32, #tpu.memory_space<vmem>>, vector<1x32xf32>
    %c3_114 = arith.constant 3 : index
    %c224_115 = arith.constant 224 : index
    %167 = vector.load %arg8[%c3_114, %c224_115] : memref<8x256xf32, #tpu.memory_space<vmem>>, vector<1x32xf32>
    tpu.vector_store %arg8[%c3_114, %c224_115], %166 {strides = array<i32>} : memref<8x256xf32, #tpu.memory_space<vmem>>, vector<1x32xf32>,
    %c8_i32_116 = arith.constant 8 : i32
    %168 = arith.muli %arg0, %c8_i32_116 : i32
    %c4_i32 = arith.constant 4 : i32
    %169 = arith.addi %168, %c4_i32 : i32
    %170 = arith.index_cast %169 : i32 to index
    %c0_117 = arith.constant 0 : index
    %171 = memref.load %arg1[%170, %c0_117] : memref<8x8xi32, #tpu.memory_space<smem>>
    %172 = arith.index_cast %171 : i32 to index
    %c0_118 = arith.constant 0 : index
    %173 = vector.load %arg2[%172, %c0_118] : memref<64x32xf32, #tpu.memory_space<vmem>>, vector<1x32xf32>
    %c4_119 = arith.constant 4 : index
    %c0_120 = arith.constant 0 : index
    %174 = vector.load %arg8[%c4_119, %c0_120] : memref<8x256xf32, #tpu.memory_space<vmem>>, vector<1x32xf32>
    tpu.vector_store %arg8[%c4_119, %c0_120], %173 {strides = array<i32>} : memref<8x256xf32, #tpu.memory_space<vmem>>, vector<1x32xf32>,
    %175 = arith.index_cast %169 : i32 to index
    %c1_121 = arith.constant 1 : index
    %176 = memref.load %arg1[%175, %c1_121] : memref<8x8xi32, #tpu.memory_space<smem>>
    %177 = arith.index_cast %176 : i32 to index
    %c0_122 = arith.constant 0 : index
    %178 = vector.load %arg2[%177, %c0_122] : memref<64x32xf32, #tpu.memory_space<vmem>>, vector<1x32xf32>
    %c4_123 = arith.constant 4 : index
    %c32_124 = arith.constant 32 : index
    %179 = vector.load %arg8[%c4_123, %c32_124] : memref<8x256xf32, #tpu.memory_space<vmem>>, vector<1x32xf32>
    tpu.vector_store %arg8[%c4_123, %c32_124], %178 {strides = array<i32>} : memref<8x256xf32, #tpu.memory_space<vmem>>, vector<1x32xf32>,
    %180 = arith.index_cast %169 : i32 to index
    %c2_125 = arith.constant 2 : index
    %181 = memref.load %arg1[%180, %c2_125] : memref<8x8xi32, #tpu.memory_space<smem>>
    %182 = arith.index_cast %181 : i32 to index
    %c0_126 = arith.constant 0 : index
    %183 = vector.load %arg2[%182, %c0_126] : memref<64x32xf32, #tpu.memory_space<vmem>>, vector<1x32xf32>
    %c4_127 = arith.constant 4 : index
    %c64_128 = arith.constant 64 : index
    %184 = vector.load %arg8[%c4_127, %c64_128] : memref<8x256xf32, #tpu.memory_space<vmem>>, vector<1x32xf32>
    tpu.vector_store %arg8[%c4_127, %c64_128], %183 {strides = array<i32>} : memref<8x256xf32, #tpu.memory_space<vmem>>, vector<1x32xf32>,
    %185 = arith.index_cast %169 : i32 to index
    %c3_129 = arith.constant 3 : index
    %186 = memref.load %arg1[%185, %c3_129] : memref<8x8xi32, #tpu.memory_space<smem>>
    %187 = arith.index_cast %186 : i32 to index
    %c0_130 = arith.constant 0 : index
    %188 = vector.load %arg2[%187, %c0_130] : memref<64x32xf32, #tpu.memory_space<vmem>>, vector<1x32xf32>
    %c4_131 = arith.constant 4 : index
    %c96_132 = arith.constant 96 : index
    %189 = vector.load %arg8[%c4_131, %c96_132] : memref<8x256xf32, #tpu.memory_space<vmem>>, vector<1x32xf32>
    tpu.vector_store %arg8[%c4_131, %c96_132], %188 {strides = array<i32>} : memref<8x256xf32, #tpu.memory_space<vmem>>, vector<1x32xf32>,
    %190 = arith.index_cast %169 : i32 to index
    %c4_133 = arith.constant 4 : index
    %191 = memref.load %arg1[%190, %c4_133] : memref<8x8xi32, #tpu.memory_space<smem>>
    %192 = arith.index_cast %191 : i32 to index
    %c0_134 = arith.constant 0 : index
    %193 = vector.load %arg2[%192, %c0_134] : memref<64x32xf32, #tpu.memory_space<vmem>>, vector<1x32xf32>
    %c4_135 = arith.constant 4 : index
    %c128_136 = arith.constant 128 : index
    %194 = vector.load %arg8[%c4_135, %c128_136] : memref<8x256xf32, #tpu.memory_space<vmem>>, vector<1x32xf32>
    tpu.vector_store %arg8[%c4_135, %c128_136], %193 {strides = array<i32>} : memref<8x256xf32, #tpu.memory_space<vmem>>, vector<1x32xf32>,
    %195 = arith.index_cast %169 : i32 to index
    %c5_137 = arith.constant 5 : index
    %196 = memref.load %arg1[%195, %c5_137] : memref<8x8xi32, #tpu.memory_space<smem>>
    %197 = arith.index_cast %196 : i32 to index
    %c0_138 = arith.constant 0 : index
    %198 = vector.load %arg2[%197, %c0_138] : memref<64x32xf32, #tpu.memory_space<vmem>>, vector<1x32xf32>
    %c4_139 = arith.constant 4 : index
    %c160_140 = arith.constant 160 : index
    %199 = vector.load %arg8[%c4_139, %c160_140] : memref<8x256xf32, #tpu.memory_space<vmem>>, vector<1x32xf32>
    tpu.vector_store %arg8[%c4_139, %c160_140], %198 {strides = array<i32>} : memref<8x256xf32, #tpu.memory_space<vmem>>, vector<1x32xf32>,
    %200 = arith.index_cast %169 : i32 to index
    %c6_141 = arith.constant 6 : index
    %201 = memref.load %arg1[%200, %c6_141] : memref<8x8xi32, #tpu.memory_space<smem>>
    %202 = arith.index_cast %201 : i32 to index
    %c0_142 = arith.constant 0 : index
    %203 = vector.load %arg2[%202, %c0_142] : memref<64x32xf32, #tpu.memory_space<vmem>>, vector<1x32xf32>
    %c4_143 = arith.constant 4 : index
    %c192_144 = arith.constant 192 : index
    %204 = vector.load %arg8[%c4_143, %c192_144] : memref<8x256xf32, #tpu.memory_space<vmem>>, vector<1x32xf32>
    tpu.vector_store %arg8[%c4_143, %c192_144], %203 {strides = array<i32>} : memref<8x256xf32, #tpu.memory_space<vmem>>, vector<1x32xf32>,
    %205 = arith.index_cast %169 : i32 to index
    %c7_145 = arith.constant 7 : index
    %206 = memref.load %arg1[%205, %c7_145] : memref<8x8xi32, #tpu.memory_space<smem>>
    %207 = arith.index_cast %206 : i32 to index
    %c0_146 = arith.constant 0 : index
    %208 = vector.load %arg2[%207, %c0_146] : memref<64x32xf32, #tpu.memory_space<vmem>>, vector<1x32xf32>
    %c4_147 = arith.constant 4 : index
    %c224_148 = arith.constant 224 : index
    %209 = vector.load %arg8[%c4_147, %c224_148] : memref<8x256xf32, #tpu.memory_space<vmem>>, vector<1x32xf32>
    tpu.vector_store %arg8[%c4_147, %c224_148], %208 {strides = array<i32>} : memref<8x256xf32, #tpu.memory_space<vmem>>, vector<1x32xf32>,
    %c8_i32_149 = arith.constant 8 : i32
    %210 = arith.muli %arg0, %c8_i32_149 : i32
    %c5_i32 = arith.constant 5 : i32
    %211 = arith.addi %210, %c5_i32 : i32
    %212 = arith.index_cast %211 : i32 to index
    %c0_150 = arith.constant 0 : index
    %213 = memref.load %arg1[%212, %c0_150] : memref<8x8xi32, #tpu.memory_space<smem>>
    %214 = arith.index_cast %213 : i32 to index
    %c0_151 = arith.constant 0 : index
    %215 = vector.load %arg2[%214, %c0_151] : memref<64x32xf32, #tpu.memory_space<vmem>>, vector<1x32xf32>
    %c5_152 = arith.constant 5 : index
    %c0_153 = arith.constant 0 : index
    %216 = vector.load %arg8[%c5_152, %c0_153] : memref<8x256xf32, #tpu.memory_space<vmem>>, vector<1x32xf32>
    tpu.vector_store %arg8[%c5_152, %c0_153], %215 {strides = array<i32>} : memref<8x256xf32, #tpu.memory_space<vmem>>, vector<1x32xf32>,
    %217 = arith.index_cast %211 : i32 to index
    %c1_154 = arith.constant 1 : index
    %218 = memref.load %arg1[%217, %c1_154] : memref<8x8xi32, #tpu.memory_space<smem>>
    %219 = arith.index_cast %218 : i32 to index
    %c0_155 = arith.constant 0 : index
    %220 = vector.load %arg2[%219, %c0_155] : memref<64x32xf32, #tpu.memory_space<vmem>>, vector<1x32xf32>
    %c5_156 = arith.constant 5 : index
    %c32_157 = arith.constant 32 : index
    %221 = vector.load %arg8[%c5_156, %c32_157] : memref<8x256xf32, #tpu.memory_space<vmem>>, vector<1x32xf32>
    tpu.vector_store %arg8[%c5_156, %c32_157], %220 {strides = array<i32>} : memref<8x256xf32, #tpu.memory_space<vmem>>, vector<1x32xf32>,
    %222 = arith.index_cast %211 : i32 to index
    %c2_158 = arith.constant 2 : index
    %223 = memref.load %arg1[%222, %c2_158] : memref<8x8xi32, #tpu.memory_space<smem>>
    %224 = arith.index_cast %223 : i32 to index
    %c0_159 = arith.constant 0 : index
    %225 = vector.load %arg2[%224, %c0_159] : memref<64x32xf32, #tpu.memory_space<vmem>>, vector<1x32xf32>
    %c5_160 = arith.constant 5 : index
    %c64_161 = arith.constant 64 : index
    %226 = vector.load %arg8[%c5_160, %c64_161] : memref<8x256xf32, #tpu.memory_space<vmem>>, vector<1x32xf32>
    tpu.vector_store %arg8[%c5_160, %c64_161], %225 {strides = array<i32>} : memref<8x256xf32, #tpu.memory_space<vmem>>, vector<1x32xf32>,
    %227 = arith.index_cast %211 : i32 to index
    %c3_162 = arith.constant 3 : index
    %228 = memref.load %arg1[%227, %c3_162] : memref<8x8xi32, #tpu.memory_space<smem>>
    %229 = arith.index_cast %228 : i32 to index
    %c0_163 = arith.constant 0 : index
    %230 = vector.load %arg2[%229, %c0_163] : memref<64x32xf32, #tpu.memory_space<vmem>>, vector<1x32xf32>
    %c5_164 = arith.constant 5 : index
    %c96_165 = arith.constant 96 : index
    %231 = vector.load %arg8[%c5_164, %c96_165] : memref<8x256xf32, #tpu.memory_space<vmem>>, vector<1x32xf32>
    tpu.vector_store %arg8[%c5_164, %c96_165], %230 {strides = array<i32>} : memref<8x256xf32, #tpu.memory_space<vmem>>, vector<1x32xf32>,
    %232 = arith.index_cast %211 : i32 to index
    %c4_166 = arith.constant 4 : index
    %233 = memref.load %arg1[%232, %c4_166] : memref<8x8xi32, #tpu.memory_space<smem>>
    %234 = arith.index_cast %233 : i32 to index
    %c0_167 = arith.constant 0 : index
    %235 = vector.load %arg2[%234, %c0_167] : memref<64x32xf32, #tpu.memory_space<vmem>>, vector<1x32xf32>
    %c5_168 = arith.constant 5 : index
    %c128_169 = arith.constant 128 : index
    %236 = vector.load %arg8[%c5_168, %c128_169] : memref<8x256xf32, #tpu.memory_space<vmem>>, vector<1x32xf32>
    tpu.vector_store %arg8[%c5_168, %c128_169], %235 {strides = array<i32>} : memref<8x256xf32, #tpu.memory_space<vmem>>, vector<1x32xf32>,
    %237 = arith.index_cast %211 : i32 to index
    %c5_170 = arith.constant 5 : index
    %238 = memref.load %arg1[%237, %c5_170] : memref<8x8xi32, #tpu.memory_space<smem>>
    %239 = arith.index_cast %238 : i32 to index
    %c0_171 = arith.constant 0 : index
    %240 = vector.load %arg2[%239, %c0_171] : memref<64x32xf32, #tpu.memory_space<vmem>>, vector<1x32xf32>
    %c5_172 = arith.constant 5 : index
    %c160_173 = arith.constant 160 : index
    %241 = vector.load %arg8[%c5_172, %c160_173] : memref<8x256xf32, #tpu.memory_space<vmem>>, vector<1x32xf32>
    tpu.vector_store %arg8[%c5_172, %c160_173], %240 {strides = array<i32>} : memref<8x256xf32, #tpu.memory_space<vmem>>, vector<1x32xf32>,
    %242 = arith.index_cast %211 : i32 to index
    %c6_174 = arith.constant 6 : index
    %243 = memref.load %arg1[%242, %c6_174] : memref<8x8xi32, #tpu.memory_space<smem>>
    %244 = arith.index_cast %243 : i32 to index
    %c0_175 = arith.constant 0 : index
    %245 = vector.load %arg2[%244, %c0_175] : memref<64x32xf32, #tpu.memory_space<vmem>>, vector<1x32xf32>
    %c5_176 = arith.constant 5 : index
    %c192_177 = arith.constant 192 : index
    %246 = vector.load %arg8[%c5_176, %c192_177] : memref<8x256xf32, #tpu.memory_space<vmem>>, vector<1x32xf32>
    tpu.vector_store %arg8[%c5_176, %c192_177], %245 {strides = array<i32>} : memref<8x256xf32, #tpu.memory_space<vmem>>, vector<1x32xf32>,
    %247 = arith.index_cast %211 : i32 to index
    %c7_178 = arith.constant 7 : index
    %248 = memref.load %arg1[%247, %c7_178] : memref<8x8xi32, #tpu.memory_space<smem>>
    %249 = arith.index_cast %248 : i32 to index
    %c0_179 = arith.constant 0 : index
    %250 = vector.load %arg2[%249, %c0_179] : memref<64x32xf32, #tpu.memory_space<vmem>>, vector<1x32xf32>
    %c5_180 = arith.constant 5 : index
    %c224_181 = arith.constant 224 : index
    %251 = vector.load %arg8[%c5_180, %c224_181] : memref<8x256xf32, #tpu.memory_space<vmem>>, vector<1x32xf32>
    tpu.vector_store %arg8[%c5_180, %c224_181], %250 {strides = array<i32>} : memref<8x256xf32, #tpu.memory_space<vmem>>, vector<1x32xf32>,
    %c8_i32_182 = arith.constant 8 : i32
    %252 = arith.muli %arg0, %c8_i32_182 : i32
    %c6_i32 = arith.constant 6 : i32
    %253 = arith.addi %252, %c6_i32 : i32
    %254 = arith.index_cast %253 : i32 to index
    %c0_183 = arith.constant 0 : index
    %255 = memref.load %arg1[%254, %c0_183] : memref<8x8xi32, #tpu.memory_space<smem>>
    %256 = arith.index_cast %255 : i32 to index
    %c0_184 = arith.constant 0 : index
    %257 = vector.load %arg2[%256, %c0_184] : memref<64x32xf32, #tpu.memory_space<vmem>>, vector<1x32xf32>
    %c6_185 = arith.constant 6 : index
    %c0_186 = arith.constant 0 : index
    %258 = vector.load %arg8[%c6_185, %c0_186] : memref<8x256xf32, #tpu.memory_space<vmem>>, vector<1x32xf32>
    tpu.vector_store %arg8[%c6_185, %c0_186], %257 {strides = array<i32>} : memref<8x256xf32, #tpu.memory_space<vmem>>, vector<1x32xf32>,
    %259 = arith.index_cast %253 : i32 to index
    %c1_187 = arith.constant 1 : index
    %260 = memref.load %arg1[%259, %c1_187] : memref<8x8xi32, #tpu.memory_space<smem>>
    %261 = arith.index_cast %260 : i32 to index
    %c0_188 = arith.constant 0 : index
    %262 = vector.load %arg2[%261, %c0_188] : memref<64x32xf32, #tpu.memory_space<vmem>>, vector<1x32xf32>
    %c6_189 = arith.constant 6 : index
    %c32_190 = arith.constant 32 : index
    %263 = vector.load %arg8[%c6_189, %c32_190] : memref<8x256xf32, #tpu.memory_space<vmem>>, vector<1x32xf32>
    tpu.vector_store %arg8[%c6_189, %c32_190], %262 {strides = array<i32>} : memref<8x256xf32, #tpu.memory_space<vmem>>, vector<1x32xf32>,
    %264 = arith.index_cast %253 : i32 to index
    %c2_191 = arith.constant 2 : index
    %265 = memref.load %arg1[%264, %c2_191] : memref<8x8xi32, #tpu.memory_space<smem>>
    %266 = arith.index_cast %265 : i32 to index
    %c0_192 = arith.constant 0 : index
    %267 = vector.load %arg2[%266, %c0_192] : memref<64x32xf32, #tpu.memory_space<vmem>>, vector<1x32xf32>
    %c6_193 = arith.constant 6 : index
    %c64_194 = arith.constant 64 : index
    %268 = vector.load %arg8[%c6_193, %c64_194] : memref<8x256xf32, #tpu.memory_space<vmem>>, vector<1x32xf32>
    tpu.vector_store %arg8[%c6_193, %c64_194], %267 {strides = array<i32>} : memref<8x256xf32, #tpu.memory_space<vmem>>, vector<1x32xf32>,
    %269 = arith.index_cast %253 : i32 to index
    %c3_195 = arith.constant 3 : index
    %270 = memref.load %arg1[%269, %c3_195] : memref<8x8xi32, #tpu.memory_space<smem>>
    %271 = arith.index_cast %270 : i32 to index
    %c0_196 = arith.constant 0 : index
    %272 = vector.load %arg2[%271, %c0_196] : memref<64x32xf32, #tpu.memory_space<vmem>>, vector<1x32xf32>
    %c6_197 = arith.constant 6 : index
    %c96_198 = arith.constant 96 : index
    %273 = vector.load %arg8[%c6_197, %c96_198] : memref<8x256xf32, #tpu.memory_space<vmem>>, vector<1x32xf32>
    tpu.vector_store %arg8[%c6_197, %c96_198], %272 {strides = array<i32>} : memref<8x256xf32, #tpu.memory_space<vmem>>, vector<1x32xf32>,
    %274 = arith.index_cast %253 : i32 to index
    %c4_199 = arith.constant 4 : index
    %275 = memref.load %arg1[%274, %c4_199] : memref<8x8xi32, #tpu.memory_space<smem>>
    %276 = arith.index_cast %275 : i32 to index
    %c0_200 = arith.constant 0 : index
    %277 = vector.load %arg2[%276, %c0_200] : memref<64x32xf32, #tpu.memory_space<vmem>>, vector<1x32xf32>
    %c6_201 = arith.constant 6 : index
    %c128_202 = arith.constant 128 : index
    %278 = vector.load %arg8[%c6_201, %c128_202] : memref<8x256xf32, #tpu.memory_space<vmem>>, vector<1x32xf32>
    tpu.vector_store %arg8[%c6_201, %c128_202], %277 {strides = array<i32>} : memref<8x256xf32, #tpu.memory_space<vmem>>, vector<1x32xf32>,
    %279 = arith.index_cast %253 : i32 to index
    %c5_203 = arith.constant 5 : index
    %280 = memref.load %arg1[%279, %c5_203] : memref<8x8xi32, #tpu.memory_space<smem>>
    %281 = arith.index_cast %280 : i32 to index
    %c0_204 = arith.constant 0 : index
    %282 = vector.load %arg2[%281, %c0_204] : memref<64x32xf32, #tpu.memory_space<vmem>>, vector<1x32xf32>
    %c6_205 = arith.constant 6 : index
    %c160_206 = arith.constant 160 : index
    %283 = vector.load %arg8[%c6_205, %c160_206] : memref<8x256xf32, #tpu.memory_space<vmem>>, vector<1x32xf32>
    tpu.vector_store %arg8[%c6_205, %c160_206], %282 {strides = array<i32>} : memref<8x256xf32, #tpu.memory_space<vmem>>, vector<1x32xf32>,
    %284 = arith.index_cast %253 : i32 to index
    %c6_207 = arith.constant 6 : index
    %285 = memref.load %arg1[%284, %c6_207] : memref<8x8xi32, #tpu.memory_space<smem>>
    %286 = arith.index_cast %285 : i32 to index
    %c0_208 = arith.constant 0 : index
    %287 = vector.load %arg2[%286, %c0_208] : memref<64x32xf32, #tpu.memory_space<vmem>>, vector<1x32xf32>
    %c6_209 = arith.constant 6 : index
    %c192_210 = arith.constant 192 : index
    %288 = vector.load %arg8[%c6_209, %c192_210] : memref<8x256xf32, #tpu.memory_space<vmem>>, vector<1x32xf32>
    tpu.vector_store %arg8[%c6_209, %c192_210], %287 {strides = array<i32>} : memref<8x256xf32, #tpu.memory_space<vmem>>, vector<1x32xf32>,
    %289 = arith.index_cast %253 : i32 to index
    %c7_211 = arith.constant 7 : index
    %290 = memref.load %arg1[%289, %c7_211] : memref<8x8xi32, #tpu.memory_space<smem>>
    %291 = arith.index_cast %290 : i32 to index
    %c0_212 = arith.constant 0 : index
    %292 = vector.load %arg2[%291, %c0_212] : memref<64x32xf32, #tpu.memory_space<vmem>>, vector<1x32xf32>
    %c6_213 = arith.constant 6 : index
    %c224_214 = arith.constant 224 : index
    %293 = vector.load %arg8[%c6_213, %c224_214] : memref<8x256xf32, #tpu.memory_space<vmem>>, vector<1x32xf32>
    tpu.vector_store %arg8[%c6_213, %c224_214], %292 {strides = array<i32>} : memref<8x256xf32, #tpu.memory_space<vmem>>, vector<1x32xf32>,
    %c8_i32_215 = arith.constant 8 : i32
    %294 = arith.muli %arg0, %c8_i32_215 : i32
    %c7_i32 = arith.constant 7 : i32
    %295 = arith.addi %294, %c7_i32 : i32
    %296 = arith.index_cast %295 : i32 to index
    %c0_216 = arith.constant 0 : index
    %297 = memref.load %arg1[%296, %c0_216] : memref<8x8xi32, #tpu.memory_space<smem>>
    %298 = arith.index_cast %297 : i32 to index
    %c0_217 = arith.constant 0 : index
    %299 = vector.load %arg2[%298, %c0_217] : memref<64x32xf32, #tpu.memory_space<vmem>>, vector<1x32xf32>
    %c7_218 = arith.constant 7 : index
    %c0_219 = arith.constant 0 : index
    %300 = vector.load %arg8[%c7_218, %c0_219] : memref<8x256xf32, #tpu.memory_space<vmem>>, vector<1x32xf32>
    tpu.vector_store %arg8[%c7_218, %c0_219], %299 {strides = array<i32>} : memref<8x256xf32, #tpu.memory_space<vmem>>, vector<1x32xf32>,
    %301 = arith.index_cast %295 : i32 to index
    %c1_220 = arith.constant 1 : index
    %302 = memref.load %arg1[%301, %c1_220] : memref<8x8xi32, #tpu.memory_space<smem>>
    %303 = arith.index_cast %302 : i32 to index
    %c0_221 = arith.constant 0 : index
    %304 = vector.load %arg2[%303, %c0_221] : memref<64x32xf32, #tpu.memory_space<vmem>>, vector<1x32xf32>
    %c7_222 = arith.constant 7 : index
    %c32_223 = arith.constant 32 : index
    %305 = vector.load %arg8[%c7_222, %c32_223] : memref<8x256xf32, #tpu.memory_space<vmem>>, vector<1x32xf32>
    tpu.vector_store %arg8[%c7_222, %c32_223], %304 {strides = array<i32>} : memref<8x256xf32, #tpu.memory_space<vmem>>, vector<1x32xf32>,
    %306 = arith.index_cast %295 : i32 to index
    %c2_224 = arith.constant 2 : index
    %307 = memref.load %arg1[%306, %c2_224] : memref<8x8xi32, #tpu.memory_space<smem>>
    %308 = arith.index_cast %307 : i32 to index
    %c0_225 = arith.constant 0 : index
    %309 = vector.load %arg2[%308, %c0_225] : memref<64x32xf32, #tpu.memory_space<vmem>>, vector<1x32xf32>
    %c7_226 = arith.constant 7 : index
    %c64_227 = arith.constant 64 : index
    %310 = vector.load %arg8[%c7_226, %c64_227] : memref<8x256xf32, #tpu.memory_space<vmem>>, vector<1x32xf32>
    tpu.vector_store %arg8[%c7_226, %c64_227], %309 {strides = array<i32>} : memref<8x256xf32, #tpu.memory_space<vmem>>, vector<1x32xf32>,
    %311 = arith.index_cast %295 : i32 to index
    %c3_228 = arith.constant 3 : index
    %312 = memref.load %arg1[%311, %c3_228] : memref<8x8xi32, #tpu.memory_space<smem>>
    %313 = arith.index_cast %312 : i32 to index
    %c0_229 = arith.constant 0 : index
    %314 = vector.load %arg2[%313, %c0_229] : memref<64x32xf32, #tpu.memory_space<vmem>>, vector<1x32xf32>
    %c7_230 = arith.constant 7 : index
    %c96_231 = arith.constant 96 : index
    %315 = vector.load %arg8[%c7_230, %c96_231] : memref<8x256xf32, #tpu.memory_space<vmem>>, vector<1x32xf32>
    tpu.vector_store %arg8[%c7_230, %c96_231], %314 {strides = array<i32>} : memref<8x256xf32, #tpu.memory_space<vmem>>, vector<1x32xf32>,
    %316 = arith.index_cast %295 : i32 to index
    %c4_232 = arith.constant 4 : index
    %317 = memref.load %arg1[%316, %c4_232] : memref<8x8xi32, #tpu.memory_space<smem>>
    %318 = arith.index_cast %317 : i32 to index
    %c0_233 = arith.constant 0 : index
    %319 = vector.load %arg2[%318, %c0_233] : memref<64x32xf32, #tpu.memory_space<vmem>>, vector<1x32xf32>
    %c7_234 = arith.constant 7 : index
    %c128_235 = arith.constant 128 : index
    %320 = vector.load %arg8[%c7_234, %c128_235] : memref<8x256xf32, #tpu.memory_space<vmem>>, vector<1x32xf32>
    tpu.vector_store %arg8[%c7_234, %c128_235], %319 {strides = array<i32>} : memref<8x256xf32, #tpu.memory_space<vmem>>, vector<1x32xf32>,
    %321 = arith.index_cast %295 : i32 to index
    %c5_236 = arith.constant 5 : index
    %322 = memref.load %arg1[%321, %c5_236] : memref<8x8xi32, #tpu.memory_space<smem>>
    %323 = arith.index_cast %322 : i32 to index
    %c0_237 = arith.constant 0 : index
    %324 = vector.load %arg2[%323, %c0_237] : memref<64x32xf32, #tpu.memory_space<vmem>>, vector<1x32xf32>
    %c7_238 = arith.constant 7 : index
    %c160_239 = arith.constant 160 : index
    %325 = vector.load %arg8[%c7_238, %c160_239] : memref<8x256xf32, #tpu.memory_space<vmem>>, vector<1x32xf32>
    tpu.vector_store %arg8[%c7_238, %c160_239], %324 {strides = array<i32>} : memref<8x256xf32, #tpu.memory_space<vmem>>, vector<1x32xf32>,
    %326 = arith.index_cast %295 : i32 to index
    %c6_240 = arith.constant 6 : index
    %327 = memref.load %arg1[%326, %c6_240] : memref<8x8xi32, #tpu.memory_space<smem>>
    %328 = arith.index_cast %327 : i32 to index
    %c0_241 = arith.constant 0 : index
    %329 = vector.load %arg2[%328, %c0_241] : memref<64x32xf32, #tpu.memory_space<vmem>>, vector<1x32xf32>
    %c7_242 = arith.constant 7 : index
    %c192_243 = arith.constant 192 : index
    %330 = vector.load %arg8[%c7_242, %c192_243] : memref<8x256xf32, #tpu.memory_space<vmem>>, vector<1x32xf32>
    tpu.vector_store %arg8[%c7_242, %c192_243], %329 {strides = array<i32>} : memref<8x256xf32, #tpu.memory_space<vmem>>, vector<1x32xf32>,
    %331 = arith.index_cast %295 : i32 to index
    %c7_244 = arith.constant 7 : index
    %332 = memref.load %arg1[%331, %c7_244] : memref<8x8xi32, #tpu.memory_space<smem>>
    %333 = arith.index_cast %332 : i32 to index
    %c0_245 = arith.constant 0 : index
    %334 = vector.load %arg2[%333, %c0_245] : memref<64x32xf32, #tpu.memory_space<vmem>>, vector<1x32xf32>
    %c7_246 = arith.constant 7 : index
    %c224_247 = arith.constant 224 : index
    %335 = vector.load %arg8[%c7_246, %c224_247] : memref<8x256xf32, #tpu.memory_space<vmem>>, vector<1x32xf32>
    tpu.vector_store %arg8[%c7_246, %c224_247], %334 {strides = array<i32>} : memref<8x256xf32, #tpu.memory_space<vmem>>, vector<1x32xf32>,
    %c0_248 = arith.constant 0 : index
    %c0_249 = arith.constant 0 : index
    %336 = vector.load %arg8[%c0_248, %c0_249] : memref<8x256xf32, #tpu.memory_space<vmem>>, vector<8x256xf32>
    %337 = arith.truncf %336 : vector<8x256xf32> to vector<8x256xbf16>
    %c0_250 = arith.constant 0 : index
    %c0_251 = arith.constant 0 : index
    %338 = vector.load %arg3[%c0_250, %c0_251] : memref<256x128xbf16, #tpu.memory_space<vmem>>, vector<256x128xbf16>
    %cst = arith.constant dense<0.000000e+00> : vector<8x128xf32>
    %339 = tpu.matmul %337, %338, %cst {dimension_numbers = #tpu.dot_dimension_numbers<[1], [0], [0], [1], [0, 0, 1, 1], [], []>} : vector<8x256xbf16>, vector<256x128xbf16>, vector<8x128xf32> -> vector<8x128xf32>
    %c0_252 = arith.constant 0 : index
    %c0_253 = arith.constant 0 : index
    %340 = vector.load %arg4[%c0_252, %c0_253] : memref<1x128xf32, #tpu.memory_space<vmem>>, vector<1x128xf32>
    %341 = vector.broadcast %340 : vector<1x128xf32> to vector<8x128xf32>
    %342 = arith.addf %339, %341 : vector<8x128xf32>
    %343 = arith.negf %342 : vector<8x128xf32>
    %344 = math.exp %343 : vector<8x128xf32>
    %cst_254 = arith.constant 1.000000e+00 : f32
    %345 = vector.broadcast %cst_254 : f32 to vector<8x128xf32>
    %346 = arith.addf %345, %344 : vector<8x128xf32>
    %347 = arith.divf %345, %346 : vector<8x128xf32>
    %348 = arith.truncf %347 : vector<8x128xf32> to vector<8x128xbf16>
    %c0_255 = arith.constant 0 : index
    %c0_256 = arith.constant 0 : index
    %349 = vector.load %arg5[%c0_255, %c0_256] : memref<128x128xbf16, #tpu.memory_space<vmem>>, vector<128x128xbf16>
    %cst_257 = arith.constant dense<0.000000e+00> : vector<8x128xf32>
    %350 = tpu.matmul %348, %349, %cst_257 {dimension_numbers = #tpu.dot_dimension_numbers<[1], [0], [0], [1], [0, 0, 1, 1], [], []>} : vector<8x128xbf16>, vector<128x128xbf16>, vector<8x128xf32> -> vector<8x128xf32>
    %c0_258 = arith.constant 0 : index
    %c0_259 = arith.constant 0 : index
    %351 = vector.load %arg6[%c0_258, %c0_259] : memref<1x128xf32, #tpu.memory_space<vmem>>, vector<1x128xf32>
    %352 = vector.broadcast %351 : vector<1x128xf32> to vector<8x128xf32>
    %353 = arith.addf %350, %352 : vector<8x128xf32>
    %c0_260 = arith.constant 0 : index
    %c0_261 = arith.constant 0 : index
    %354 = vector.load %arg7[%c0_260, %c0_261] : memref<8x128xf32, #tpu.memory_space<vmem>>, vector<8x128xf32>
    tpu.vector_store %arg7[%c0_260, %c0_261], %353 {strides = array<i32>} : memref<8x128xf32, #tpu.memory_space<vmem>>, vector<8x128xf32>,
    return
  }
  func.func @transform_0(%arg0: i32) -> (i32, i32) {
    %c0_i32 = arith.constant 0 : i32
    %c0_i32_0 = arith.constant 0 : i32
    %c0_i32_1 = arith.constant 0 : i32
    return %c0_i32, %c0_i32_0 : i32, i32
  }
  func.func @transform_1(%arg0: i32) -> (i32, i32) {
    %c0_i32 = arith.constant 0 : i32
    %c0_i32_0 = arith.constant 0 : i32
    %c0_i32_1 = arith.constant 0 : i32
    return %c0_i32, %c0_i32_0 : i32, i32
  }
  func.func @transform_2(%arg0: i32) -> (i32, i32) {
    %c0_i32 = arith.constant 0 : i32
    %c0_i32_0 = arith.constant 0 : i32
    %c0_i32_1 = arith.constant 0 : i32
    return %c0_i32, %c0_i32_0 : i32, i32
  }
  func.func @transform_3(%arg0: i32) -> (i32, i32) {
    %c0_i32 = arith.constant 0 : i32
    %c0_i32_0 = arith.constant 0 : i32
    %c0_i32_1 = arith.constant 0 : i32
    return %c0_i32, %c0_i32_0 : i32, i32
  }
  func.func @transform_4(%arg0: i32) -> (i32, i32) {
    %c0_i32 = arith.constant 0 : i32
    %c0_i32_0 = arith.constant 0 : i32
    %c0_i32_1 = arith.constant 0 : i32
    return %c0_i32, %c0_i32_0 : i32, i32
  }
  func.func @transform_5(%arg0: i32) -> (i32, i32) {
    %c0_i32 = arith.constant 0 : i32
    %c0_i32_0 = arith.constant 0 : i32
    %c0_i32_1 = arith.constant 0 : i32
    return %c0_i32, %c0_i32_0 : i32, i32
  }
  func.func @transform_6(%arg0: i32) -> (i32, i32) {
    %c0_i32 = arith.constant 0 : i32
    %c0_i32_0 = arith.constant 0 : i32
    return %arg0, %c0_i32 : i32, i32
  }
}

</mosaic_0001>

<llo_original>
// kernel: tpu_custom_call.1
$region0: #{tpu_custom_call.1}
  #allocation0 [shape = 'u32[]', space=smem, size = 0x4, offset = 0x4, fixed_abs, tag = 'smem constant byte address 0x4 - core index']
  #allocation1 [shape = 'u32[72,128]{1,0:T(1,128)}', space=vmem, size = 0x9000, scoped, tag = 'internal scratch']
  #allocation2 [shape = 'f32[8,256]{1,0:T(8,128)}', space=vmem, size = 0x2000, scoped, tag = 'scratch operand']
  %s0 = inlined_call_operand.vmem [shape: s32[8,8], index: 0, kind: input, shape index: {}]
  %s1 = inlined_call_operand.vmem [shape: f32[64,32], index: 1, kind: input, shape index: {}]
  %s2 = inlined_call_operand.hbm [shape: bf16[256,128], index: 2, kind: input, shape index: {}]
  %s3 = inlined_call_operand.vmem [shape: f32[1,128], index: 3, kind: input, shape index: {}]
  %s4 = inlined_call_operand.vmem [shape: bf16[128,128], index: 4, kind: input, shape index: {}]
  %s5 = inlined_call_operand.vmem [shape: f32[1,128], index: 5, kind: input, shape index: {}]
  %s6 = inlined_call_operand.hbm [shape: f32[8,128], index: 6, kind: output, shape index: {}]
  %s7 = sld [smem:[#allocation0]]
  $region42: #{tpu_custom_call.1} parent=0
    _
  %s9 = ssub.s32 1, %s7
  %s10 = scalar_select 0, %s9, %s7
  $region1: #{tpu_custom_call.1} parent=0
    #allocation3 [shape = 'u8[4096]{0}', space=smem, size = 0x1000, scoped, tag = 'input window, operand 0, single buffered']
    #allocation4 [shape = 's32[1]{0}', space=sflag, size = 0x4, scoped, tag = 'scoped memory for tpu_custom_call.1']
    #allocation5 [shape = 's32[1]{0}', space=sflag, size = 0x4, scoped, tag = 'scoped memory for tpu_custom_call.1']
    #allocation6 [shape = 's32[1]{0}', space=sflag, size = 0x4, scoped, tag = 'scoped memory for tpu_custom_call.1']
    #allocation7 [shape = 'u8[65536]{0}', space=vmem, size = 0x10000, scoped, tag = 'input window, operand 2, single buffered']
    #allocation8 [shape = 'u8[4096]{0}', space=vmem, size = 0x1000, scoped, tag = 'output window, operand 0, single buffered']
    %11 = vsyncpa [#allocation6], 0
    %12 = vsyncpa [#allocation4], 0
    %13 = vsyncpa [#allocation5], 0
    // Predicated region
    $region2: #{tpu_custom_call.1} parent=1 // pred_check
      _
    $region3: #{tpu_custom_call.1} parent=1 // pred_check_branch
      %15 = sbr.rel (0) target = $region5
    $region4: #{tpu_custom_call.1} parent=1 // pred_region
      %17 = vsyncadd [#allocation6], 0
      %s19 = sshll.u32 %s0, 4
      %s20 = int_to_ptr.vmem [resolvable:$true] %s19
      %22 = dma.vmem_to_smem %s20, 128, [#allocation3], [#allocation6]
    $region5: #{tpu_custom_call.1} parent=1 // pred_fallthru
      _
    // Predicated region
    $region6: #{tpu_custom_call.1} parent=1 // pred_check
      _
    $region7: #{tpu_custom_call.1} parent=1 // pred_check_branch
      %24 = sbr.rel (0) target = $region9
    $region8: #{tpu_custom_call.1} parent=1 // pred_region
      _
    $region9: #{tpu_custom_call.1} parent=1 // pred_fallthru
      _
    // Predicated region
    $region10: #{tpu_custom_call.1} parent=1 // pred_check
      _
    $region11: #{tpu_custom_call.1} parent=1 // pred_check_branch
      %26 = sbr.rel (0) target = $region13
    $region12: #{tpu_custom_call.1} parent=1 // pred_region
      %28 = vsyncadd [#allocation4], 0
      %s29 = sshll.u32 %s2, 4
      %s30 = int_to_ptr.hbm [resolvable:$true] %s29
      %s31 = sshll.u32 [#allocation7], 4
      %s32 = int_to_ptr.vmem [resolvable:$true] %s31
      %37 = dma.hbm_to_vmem [thread:$0]  %s30, 2048, %s32, [#allocation4], 64, 64, 4
    $region13: #{tpu_custom_call.1} parent=1 // pred_fallthru
      _
    // Predicated region
    $region14: #{tpu_custom_call.1} parent=1 // pred_check
      _
    $region15: #{tpu_custom_call.1} parent=1 // pred_check_branch
      %39 = sbr.rel (0) target = $region17
    $region16: #{tpu_custom_call.1} parent=1 // pred_region
      _
    $region17: #{tpu_custom_call.1} parent=1 // pred_fallthru
      _
    // Predicated region
    $region18: #{tpu_custom_call.1} parent=1 // pred_check
      _
    $region19: #{tpu_custom_call.1} parent=1 // pred_check_branch
      %41 = sbr.rel (0) target = $region21
    $region20: #{tpu_custom_call.1} parent=1 // pred_region
      _
    $region21: #{tpu_custom_call.1} parent=1 // pred_fallthru
      _
    // Predicated region
    $region22: #{tpu_custom_call.1} parent=1 // pred_check
      _
    $region23: #{tpu_custom_call.1} parent=1 // pred_check_branch
      %43 = sbr.rel (0) target = $region25
    $region24: #{tpu_custom_call.1} parent=1 // pred_region
      _
    $region25: #{tpu_custom_call.1} parent=1 // pred_fallthru
      _
    // Predicated region
    $region26: #{tpu_custom_call.1} parent=1 // pred_check
      _
    $region27: #{tpu_custom_call.1} parent=1 // pred_check_branch
      %45 = sbr.rel (0) target = $region29
    $region28: #{tpu_custom_call.1} parent=1 // pred_region
      %47 = dma.done [#allocation6], 128
    $region29: #{tpu_custom_call.1} parent=1 // pred_fallthru
      _
    // Predicated region
    $region30: #{tpu_custom_call.1} parent=1 // pred_check
      _
    $region31: #{tpu_custom_call.1} parent=1 // pred_check_branch
      %49 = sbr.rel (0) target = $region33
    $region32: #{tpu_custom_call.1} parent=1 // pred_region
      %51 = dma.done [#allocation4], 2048
    $region33: #{tpu_custom_call.1} parent=1 // pred_fallthru
      _
    %52 = sfence
    %s53 = smul.u32 0, 8
    %s54 = smul.u32 %s53, 128
    %s55 = sld [smem:[#allocation3 + %s54]]
    %s56 = scalar_lea.vmem %s1, %s55
    %v57 = vld [vmem:[%s56] sm:$0x1]
    %vm58 = vcmask 253952
    %59 = vst.msk [vmem:[#allocation2] sm:$0x1] %vm58, %v57
    %s60 = sadd.s32 %s54, 1
    %s61 = sld [smem:[#allocation3 + %s60]]
    %s62 = scalar_lea.vmem %s1, %s61
    %v63 = vld [vmem:[%s62] sm:$0x1]
    %65 = vrot.lane.b32.xlu0 %v63, 32
    %v66 = vpop.permute.xlu0 %65
    %vm68 = vcmask 516352
    %69 = vst.msk [vmem:[#allocation2] sm:$0x1] %vm68, %v66
    %s70 = sadd.s32 %s54, 2
    %s71 = sld [smem:[#allocation3 + %s70]]
    %s72 = scalar_lea.vmem %s1, %s71
    %v73 = vld [vmem:[%s72] sm:$0x1]
    %75 = vrot.lane.b32.xlu0 %v73, 64
    %v76 = vpop.permute.xlu0 %75
    %vm78 = vcmask 778752
    %79 = vst.msk [vmem:[#allocation2] sm:$0x1] %vm78, %v76
    %s80 = sadd.s32 %s54, 3
    %s81 = sld [smem:[#allocation3 + %s80]]
    %s82 = scalar_lea.vmem %s1, %s81
    %v83 = vld [vmem:[%s82] sm:$0x1]
    %85 = vrot.lane.b32.xlu0 %v83, 96
    %v86 = vpop.permute.xlu0 %85
    %vm88 = vcmask 1041152
    %89 = vst.msk [vmem:[#allocation2] sm:$0x1] %vm88, %v86
    %s90 = sadd.s32 %s54, 4
    %s91 = sld [smem:[#allocation3 + %s90]]
    %s92 = scalar_lea.vmem %s1, %s91
    %v93 = vld [vmem:[%s92] sm:$0x1]
    %94 = vst.msk [vmem:[#allocation2 + $0x8] sm:$0x1] %vm58, %v93
    %s95 = sadd.s32 %s54, 5
    %s96 = sld [smem:[#allocation3 + %s95]]
    %s97 = scalar_lea.vmem %s1, %s96
    %v98 = vld [vmem:[%s97] sm:$0x1]
    %100 = vrot.lane.b32.xlu0 %v98, 32
    %v101 = vpop.permute.xlu0 %100
    %103 = vst.msk [vmem:[#allocation2 + $0x8] sm:$0x1] %vm68, %v101
    %s104 = sadd.s32 %s54, 6
    %s105 = sld [smem:[#allocation3 + %s104]]
    %s106 = scalar_lea.vmem %s1, %s105
    %v107 = vld [vmem:[%s106] sm:$0x1]
    %109 = vrot.lane.b32.xlu0 %v107, 64
    %v110 = vpop.permute.xlu0 %109
    %112 = vst.msk [vmem:[#allocation2 + $0x8] sm:$0x1] %vm78, %v110
    %s113 = sadd.s32 %s54, 7
    %s114 = sld [smem:[#allocation3 + %s113]]
    %s115 = scalar_lea.vmem %s1, %s114
    %v116 = vld [vmem:[%s115] sm:$0x1]
    %118 = vrot.lane.b32.xlu0 %v116, 96
    %v119 = vpop.permute.xlu0 %118
    %121 = vst.msk [vmem:[#allocation2 + $0x8] sm:$0x1] %vm88, %v119
    %s122 = sadd.s32 %s53, 1
    %s123 = smul.u32 %s122, 128
    %s124 = sld [smem:[#allocation3 + %s123]]
    %s125 = scalar_lea.vmem %s1, %s124
    %v126 = vld [vmem:[%s125] sm:$0x1]
    %127 = vst.msk [vmem:[#allocation2 + $0x1] sm:$0x1] %vm58, %v126
    %s128 = sadd.s32 %s123, 1
    %s129 = sld [smem:[#allocation3 + %s128]]
    %s130 = scalar_lea.vmem %s1, %s129
    %v131 = vld [vmem:[%s130] sm:$0x1]
    %133 = vrot.lane.b32.xlu0 %v131, 32
    %v134 = vpop.permute.xlu0 %133
    %136 = vst.msk [vmem:[#allocation2 + $0x1] sm:$0x1] %vm68, %v134
    %s137 = sadd.s32 %s123, 2
    %s138 = sld [smem:[#allocation3 + %s137]]
    %s139 = scalar_lea.vmem %s1, %s138
    %v140 = vld [vmem:[%s139] sm:$0x1]
    %142 = vrot.lane.b32.xlu0 %v140, 64
    %v143 = vpop.permute.xlu0 %142
    %145 = vst.msk [vmem:[#allocation2 + $0x1] sm:$0x1] %vm78, %v143
    %s146 = sadd.s32 %s123, 3
    %s147 = sld [smem:[#allocation3 + %s146]]
    %s148 = scalar_lea.vmem %s1, %s147
    %v149 = vld [vmem:[%s148] sm:$0x1]
    %151 = vrot.lane.b32.xlu0 %v149, 96
    %v152 = vpop.permute.xlu0 %151
    %154 = vst.msk [vmem:[#allocation2 + $0x1] sm:$0x1] %vm88, %v152
    %s155 = sadd.s32 %s123, 4
    %s156 = sld [smem:[#allocation3 + %s155]]
    %s157 = scalar_lea.vmem %s1, %s156
    %v158 = vld [vmem:[%s157] sm:$0x1]
    %159 = vst.msk [vmem:[#allocation2 + $0x9] sm:$0x1] %vm58, %v158
    %s160 = sadd.s32 %s123, 5
    %s161 = sld [smem:[#allocation3 + %s160]]
    %s162 = scalar_lea.vmem %s1, %s161
    %v163 = vld [vmem:[%s162] sm:$0x1]
    %165 = vrot.lane.b32.xlu0 %v163, 32
    %v166 = vpop.permute.xlu0 %165
    %168 = vst.msk [vmem:[#allocation2 + $0x9] sm:$0x1] %vm68, %v166
    %s169 = sadd.s32 %s123, 6
    %s170 = sld [smem:[#allocation3 + %s169]]
    %s171 = scalar_lea.vmem %s1, %s170
    %v172 = vld [vmem:[%s171] sm:$0x1]
    %174 = vrot.lane.b32.xlu0 %v172, 64
    %v175 = vpop.permute.xlu0 %174
    %177 = vst.msk [vmem:[#allocation2 + $0x9] sm:$0x1] %vm78, %v175
    %s178 = sadd.s32 %s123, 7
    %s179 = sld [smem:[#allocation3 + %s178]]
    %s180 = scalar_lea.vmem %s1, %s179
    %v181 = vld [vmem:[%s180] sm:$0x1]
    %183 = vrot.lane.b32.xlu0 %v181, 96
    %v184 = vpop.permute.xlu0 %183
    %186 = vst.msk [vmem:[#allocation2 + $0x9] sm:$0x1] %vm88, %v184
    %s187 = sadd.s32 %s53, 2
    %s188 = smul.u32 %s187, 128
    %s189 = sld [smem:[#allocation3 + %s188]]
    %s190 = scalar_lea.vmem %s1, %s189
    %v191 = vld [vmem:[%s190] sm:$0x1]
    %192 = vst.msk [vmem:[#allocation2 + $0x2] sm:$0x1] %vm58, %v191
    %s193 = sadd.s32 %s188, 1
    %s194 = sld [smem:[#allocation3 + %s193]]
    %s195 = scalar_lea.vmem %s1, %s194
    %v196 = vld [vmem:[%s195] sm:$0x1]
    %198 = vrot.lane.b32.xlu0 %v196, 32
    %v199 = vpop.permute.xlu0 %198
    %201 = vst.msk [vmem:[#allocation2 + $0x2] sm:$0x1] %vm68, %v199
    %s202 = sadd.s32 %s188, 2
    %s203 = sld [smem:[#allocation3 + %s202]]
    %s204 = scalar_lea.vmem %s1, %s203
    %v205 = vld [vmem:[%s204] sm:$0x1]
    %207 = vrot.lane.b32.xlu0 %v205, 64
    %v208 = vpop.permute.xlu0 %207
    %210 = vst.msk [vmem:[#allocation2 + $0x2] sm:$0x1] %vm78, %v208
    %s211 = sadd.s32 %s188, 3
    %s212 = sld [smem:[#allocation3 + %s211]]
    %s213 = scalar_lea.vmem %s1, %s212
    %v214 = vld [vmem:[%s213] sm:$0x1]
    %216 = vrot.lane.b32.xlu0 %v214, 96
    %v217 = vpop.permute.xlu0 %216
    %219 = vst.msk [vmem:[#allocation2 + $0x2] sm:$0x1] %vm88, %v217
    %s220 = sadd.s32 %s188, 4
    %s221 = sld [smem:[#allocation3 + %s220]]
    %s222 = scalar_lea.vmem %s1, %s221
    %v223 = vld [vmem:[%s222] sm:$0x1]
    %224 = vst.msk [vmem:[#allocation2 + $0xa] sm:$0x1] %vm58, %v223
    %s225 = sadd.s32 %s188, 5
    %s226 = sld [smem:[#allocation3 + %s225]]
    %s227 = scalar_lea.vmem %s1, %s226
    %v228 = vld [vmem:[%s227] sm:$0x1]
    %230 = vrot.lane.b32.xlu0 %v228, 32
    %v231 = vpop.permute.xlu0 %230
    %233 = vst.msk [vmem:[#allocation2 + $0xa] sm:$0x1] %vm68, %v231
    %s234 = sadd.s32 %s188, 6
    %s235 = sld [smem:[#allocation3 + %s234]]
    %s236 = scalar_lea.vmem %s1, %s235
    %v237 = vld [vmem:[%s236] sm:$0x1]
    %239 = vrot.lane.b32.xlu0 %v237, 64
    %v240 = vpop.permute.xlu0 %239
    %242 = vst.msk [vmem:[#allocation2 + $0xa] sm:$0x1] %vm78, %v240
    %s243 = sadd.s32 %s188, 7
    %s244 = sld [smem:[#allocation3 + %s243]]
    %s245 = scalar_lea.vmem %s1, %s244
    %v246 = vld [vmem:[%s245] sm:$0x1]
    %248 = vrot.lane.b32.xlu0 %v246, 96
    %v249 = vpop.permute.xlu0 %248
    %251 = vst.msk [vmem:[#allocation2 + $0xa] sm:$0x1] %vm88, %v249
    %s252 = sadd.s32 %s53, 3
    %s253 = smul.u32 %s252, 128
    %s254 = sld [smem:[#allocation3 + %s253]]
    %s255 = scalar_lea.vmem %s1, %s254
    %v256 = vld [vmem:[%s255] sm:$0x1]
    %257 = vst.msk [vmem:[#allocation2 + $0x3] sm:$0x1] %vm58, %v256
    %s258 = sadd.s32 %s253, 1
    %s259 = sld [smem:[#allocation3 + %s258]]
    %s260 = scalar_lea.vmem %s1, %s259
    %v261 = vld [vmem:[%s260] sm:$0x1]
    %263 = vrot.lane.b32.xlu0 %v261, 32
    %v264 = vpop.permute.xlu0 %263
    %266 = vst.msk [vmem:[#allocation2 + $0x3] sm:$0x1] %vm68, %v264
    %s267 = sadd.s32 %s253, 2
    %s268 = sld [smem:[#allocation3 + %s267]]
    %s269 = scalar_lea.vmem %s1, %s268
    %v270 = vld [vmem:[%s269] sm:$0x1]
    %272 = vrot.lane.b32.xlu0 %v270, 64
    %v273 = vpop.permute.xlu0 %272
    %275 = vst.msk [vmem:[#allocation2 + $0x3] sm:$0x1] %vm78, %v273
    %s276 = sadd.s32 %s253, 3
    %s277 = sld [smem:[#allocation3 + %s276]]
    %s278 = scalar_lea.vmem %s1, %s277
    %v279 = vld [vmem:[%s278] sm:$0x1]
    %281 = vrot.lane.b32.xlu0 %v279, 96
    %v282 = vpop.permute.xlu0 %281
    %284 = vst.msk [vmem:[#allocation2 + $0x3] sm:$0x1] %vm88, %v282
    %s285 = sadd.s32 %s253, 4
    %s286 = sld [smem:[#allocation3 + %s285]]
    %s287 = scalar_lea.vmem %s1, %s286
    %v288 = vld [vmem:[%s287] sm:$0x1]
    %289 = vst.msk [vmem:[#allocation2 + $0xb] sm:$0x1] %vm58, %v288
    %s290 = sadd.s32 %s253, 5
    %s291 = sld [smem:[#allocation3 + %s290]]
    %s292 = scalar_lea.vmem %s1, %s291
    %v293 = vld [vmem:[%s292] sm:$0x1]
    %295 = vrot.lane.b32.xlu0 %v293, 32
    %v296 = vpop.permute.xlu0 %295
    %298 = vst.msk [vmem:[#allocation2 + $0xb] sm:$0x1] %vm68, %v296
    %s299 = sadd.s32 %s253, 6
    %s300 = sld [smem:[#allocation3 + %s299]]
    %s301 = scalar_lea.vmem %s1, %s300
    %v302 = vld [vmem:[%s301] sm:$0x1]
    %304 = vrot.lane.b32.xlu0 %v302, 64
    %v305 = vpop.permute.xlu0 %304
    %307 = vst.msk [vmem:[#allocation2 + $0xb] sm:$0x1] %vm78, %v305
    %s308 = sadd.s32 %s253, 7
    %s309 = sld [smem:[#allocation3 + %s308]]
    %s310 = scalar_lea.vmem %s1, %s309
    %v311 = vld [vmem:[%s310] sm:$0x1]
    %313 = vrot.lane.b32.xlu0 %v311, 96
    %v314 = vpop.permute.xlu0 %313
    %316 = vst.msk [vmem:[#allocation2 + $0xb] sm:$0x1] %vm88, %v314
    %s317 = sadd.s32 %s53, 4
    %s318 = smul.u32 %s317, 128
    %s319 = sld [smem:[#allocation3 + %s318]]
    %s320 = scalar_lea.vmem %s1, %s319
    %v321 = vld [vmem:[%s320] sm:$0x1]
    %322 = vst.msk [vmem:[#allocation2 + $0x4] sm:$0x1] %vm58, %v321
    %s323 = sadd.s32 %s318, 1
    %s324 = sld [smem:[#allocation3 + %s323]]
    %s325 = scalar_lea.vmem %s1, %s324
    %v326 = vld [vmem:[%s325] sm:$0x1]
    %328 = vrot.lane.b32.xlu0 %v326, 32
    %v329 = vpop.permute.xlu0 %328
    %331 = vst.msk [vmem:[#allocation2 + $0x4] sm:$0x1] %vm68, %v329
    %s332 = sadd.s32 %s318, 2
    %s333 = sld [smem:[#allocation3 + %s332]]
    %s334 = scalar_lea.vmem %s1, %s333
    %v335 = vld [vmem:[%s334] sm:$0x1]
    %337 = vrot.lane.b32.xlu0 %v335, 64
    %v338 = vpop.permute.xlu0 %337
    %340 = vst.msk [vmem:[#allocation2 + $0x4] sm:$0x1] %vm78, %v338
    %s341 = sadd.s32 %s318, 3
    %s342 = sld [smem:[#allocation3 + %s341]]
    %s343 = scalar_lea.vmem %s1, %s342
    %v344 = vld [vmem:[%s343] sm:$0x1]
    %346 = vrot.lane.b32.xlu0 %v344, 96
    %v347 = vpop.permute.xlu0 %346
    %349 = vst.msk [vmem:[#allocation2 + $0x4] sm:$0x1] %vm88, %v347
    %s350 = sadd.s32 %s318, 4
    %s351 = sld [smem:[#allocation3 + %s350]]
    %s352 = scalar_lea.vmem %s1, %s351
    %v353 = vld [vmem:[%s352] sm:$0x1]
    %354 = vst.msk [vmem:[#allocation2 + $0xc] sm:$0x1] %vm58, %v353
    %s355 = sadd.s32 %s318, 5
    %s356 = sld [smem:[#allocation3 + %s355]]
    %s357 = scalar_lea.vmem %s1, %s356
    %v358 = vld [vmem:[%s357] sm:$0x1]
    %360 = vrot.lane.b32.xlu0 %v358, 32
    %v361 = vpop.permute.xlu0 %360
    %363 = vst.msk [vmem:[#allocation2 + $0xc] sm:$0x1] %vm68, %v361
    %s364 = sadd.s32 %s318, 6
    %s365 = sld [smem:[#allocation3 + %s364]]
    %s366 = scalar_lea.vmem %s1, %s365
    %v367 = vld [vmem:[%s366] sm:$0x1]
    %369 = vrot.lane.b32.xlu0 %v367, 64
    %v370 = vpop.permute.xlu0 %369
    %372 = vst.msk [vmem:[#allocation2 + $0xc] sm:$0x1] %vm78, %v370
    %s373 = sadd.s32 %s318, 7
    %s374 = sld [smem:[#allocation3 + %s373]]
    %s375 = scalar_lea.vmem %s1, %s374
    %v376 = vld [vmem:[%s375] sm:$0x1]
    %378 = vrot.lane.b32.xlu0 %v376, 96
    %v379 = vpop.permute.xlu0 %378
    %381 = vst.msk [vmem:[#allocation2 + $0xc] sm:$0x1] %vm88, %v379
    %s382 = sadd.s32 %s53, 5
    %s383 = smul.u32 %s382, 128
    %s384 = sld [smem:[#allocation3 + %s383]]
    %s385 = scalar_lea.vmem %s1, %s384
    %v386 = vld [vmem:[%s385] sm:$0x1]
    %387 = vst.msk [vmem:[#allocation2 + $0x5] sm:$0x1] %vm58, %v386
    %s388 = sadd.s32 %s383, 1
    %s389 = sld [smem:[#allocation3 + %s388]]
    %s390 = scalar_lea.vmem %s1, %s389
    %v391 = vld [vmem:[%s390] sm:$0x1]
    %393 = vrot.lane.b32.xlu0 %v391, 32
    %v394 = vpop.permute.xlu0 %393
    %396 = vst.msk [vmem:[#allocation2 + $0x5] sm:$0x1] %vm68, %v394
    %s397 = sadd.s32 %s383, 2
    %s398 = sld [smem:[#allocation3 + %s397]]
    %s399 = scalar_lea.vmem %s1, %s398
    %v400 = vld [vmem:[%s399] sm:$0x1]
    %402 = vrot.lane.b32.xlu0 %v400, 64
    %v403 = vpop.permute.xlu0 %402
    %405 = vst.msk [vmem:[#allocation2 + $0x5] sm:$0x1] %vm78, %v403
    %s406 = sadd.s32 %s383, 3
    %s407 = sld [smem:[#allocation3 + %s406]]
    %s408 = scalar_lea.vmem %s1, %s407
    %v409 = vld [vmem:[%s408] sm:$0x1]
    %411 = vrot.lane.b32.xlu0 %v409, 96
    %v412 = vpop.permute.xlu0 %411
    %414 = vst.msk [vmem:[#allocation2 + $0x5] sm:$0x1] %vm88, %v412
    %s415 = sadd.s32 %s383, 4
    %s416 = sld [smem:[#allocation3 + %s415]]
    %s417 = scalar_lea.vmem %s1, %s416
    %v418 = vld [vmem:[%s417] sm:$0x1]
    %419 = vst.msk [vmem:[#allocation2 + $0xd] sm:$0x1] %vm58, %v418
    %s420 = sadd.s32 %s383, 5
    %s421 = sld [smem:[#allocation3 + %s420]]
    %s422 = scalar_lea.vmem %s1, %s421
    %v423 = vld [vmem:[%s422] sm:$0x1]
    %425 = vrot.lane.b32.xlu0 %v423, 32
    %v426 = vpop.permute.xlu0 %425
    %428 = vst.msk [vmem:[#allocation2 + $0xd] sm:$0x1] %vm68, %v426
    %s429 = sadd.s32 %s383, 6
    %s430 = sld [smem:[#allocation3 + %s429]]
    %s431 = scalar_lea.vmem %s1, %s430
    %v432 = vld [vmem:[%s431] sm:$0x1]
    %434 = vrot.lane.b32.xlu0 %v432, 64
    %v435 = vpop.permute.xlu0 %434
    %437 = vst.msk [vmem:[#allocation2 + $0xd] sm:$0x1] %vm78, %v435
    %s438 = sadd.s32 %s383, 7
    %s439 = sld [smem:[#allocation3 + %s438]]
    %s440 = scalar_lea.vmem %s1, %s439
    %v441 = vld [vmem:[%s440] sm:$0x1]
    %443 = vrot.lane.b32.xlu0 %v441, 96
    %v444 = vpop.permute.xlu0 %443
    %446 = vst.msk [vmem:[#allocation2 + $0xd] sm:$0x1] %vm88, %v444
    %s447 = sadd.s32 %s53, 6
    %s448 = smul.u32 %s447, 128
    %s449 = sld [smem:[#allocation3 + %s448]]
    %s450 = scalar_lea.vmem %s1, %s449
    %v451 = vld [vmem:[%s450] sm:$0x1]
    %452 = vst.msk [vmem:[#allocation2 + $0x6] sm:$0x1] %vm58, %v451
    %s453 = sadd.s32 %s448, 1
    %s454 = sld [smem:[#allocation3 + %s453]]
    %s455 = scalar_lea.vmem %s1, %s454
    %v456 = vld [vmem:[%s455] sm:$0x1]
    %458 = vrot.lane.b32.xlu0 %v456, 32
    %v459 = vpop.permute.xlu0 %458
    %461 = vst.msk [vmem:[#allocation2 + $0x6] sm:$0x1] %vm68, %v459
    %s462 = sadd.s32 %s448, 2
    %s463 = sld [smem:[#allocation3 + %s462]]
    %s464 = scalar_lea.vmem %s1, %s463
    %v465 = vld [vmem:[%s464] sm:$0x1]
    %467 = vrot.lane.b32.xlu0 %v465, 64
    %v468 = vpop.permute.xlu0 %467
    %470 = vst.msk [vmem:[#allocation2 + $0x6] sm:$0x1] %vm78, %v468
    %s471 = sadd.s32 %s448, 3
    %s472 = sld [smem:[#allocation3 + %s471]]
    %s473 = scalar_lea.vmem %s1, %s472
    %v474 = vld [vmem:[%s473] sm:$0x1]
    %476 = vrot.lane.b32.xlu0 %v474, 96
    %v477 = vpop.permute.xlu0 %476
    %479 = vst.msk [vmem:[#allocation2 + $0x6] sm:$0x1] %vm88, %v477
    %s480 = sadd.s32 %s448, 4
    %s481 = sld [smem:[#allocation3 + %s480]]
    %s482 = scalar_lea.vmem %s1, %s481
    %v483 = vld [vmem:[%s482] sm:$0x1]
    %484 = vst.msk [vmem:[#allocation2 + $0xe] sm:$0x1] %vm58, %v483
    %s485 = sadd.s32 %s448, 5
    %s486 = sld [smem:[#allocation3 + %s485]]
    %s487 = scalar_lea.vmem %s1, %s486
    %v488 = vld [vmem:[%s487] sm:$0x1]
    %490 = vrot.lane.b32.xlu0 %v488, 32
    %v491 = vpop.permute.xlu0 %490
    %493 = vst.msk [vmem:[#allocation2 + $0xe] sm:$0x1] %vm68, %v491
    %s494 = sadd.s32 %s448, 6
    %s495 = sld [smem:[#allocation3 + %s494]]
    %s496 = scalar_lea.vmem %s1, %s495
    %v497 = vld [vmem:[%s496] sm:$0x1]
    %499 = vrot.lane.b32.xlu0 %v497, 64
    %v500 = vpop.permute.xlu0 %499
    %502 = vst.msk [vmem:[#allocation2 + $0xe] sm:$0x1] %vm78, %v500
    %s503 = sadd.s32 %s448, 7
    %s504 = sld [smem:[#allocation3 + %s503]]
    %s505 = scalar_lea.vmem %s1, %s504
    %v506 = vld [vmem:[%s505] sm:$0x1]
    %508 = vrot.lane.b32.xlu0 %v506, 96
    %v509 = vpop.permute.xlu0 %508
    %511 = vst.msk [vmem:[#allocation2 + $0xe] sm:$0x1] %vm88, %v509
    %s512 = sadd.s32 %s53, 7
    %s513 = smul.u32 %s512, 128
    %s514 = sld [smem:[#allocation3 + %s513]]
    %s515 = scalar_lea.vmem %s1, %s514
    %v516 = vld [vmem:[%s515] sm:$0x1]
    %517 = vst.msk [vmem:[#allocation2 + $0x7] sm:$0x1] %vm58, %v516
    %s518 = sadd.s32 %s513, 1
    %s519 = sld [smem:[#allocation3 + %s518]]
    %s520 = scalar_lea.vmem %s1, %s519
    %v521 = vld [vmem:[%s520] sm:$0x1]
    %523 = vrot.lane.b32.xlu0 %v521, 32
    %v524 = vpop.permute.xlu0 %523
    %526 = vst.msk [vmem:[#allocation2 + $0x7] sm:$0x1] %vm68, %v524
    %s527 = sadd.s32 %s513, 2
    %s528 = sld [smem:[#allocation3 + %s527]]
    %s529 = scalar_lea.vmem %s1, %s528
    %v530 = vld [vmem:[%s529] sm:$0x1]
    %532 = vrot.lane.b32.xlu0 %v530, 64
    %v533 = vpop.permute.xlu0 %532
    %535 = vst.msk [vmem:[#allocation2 + $0x7] sm:$0x1] %vm78, %v533
    %s536 = sadd.s32 %s513, 3
    %s537 = sld [smem:[#allocation3 + %s536]]
    %s538 = scalar_lea.vmem %s1, %s537
    %v539 = vld [vmem:[%s538] sm:$0x1]
    %541 = vrot.lane.b32.xlu0 %v539, 96
    %v542 = vpop.permute.xlu0 %541
    %544 = vst.msk [vmem:[#allocation2 + $0x7] sm:$0x1] %vm88, %v542
    %s545 = sadd.s32 %s513, 4
    %s546 = sld [smem:[#allocation3 + %s545]]
    %s547 = scalar_lea.vmem %s1, %s546
    %v548 = vld [vmem:[%s547] sm:$0x1]
    %549 = vst.msk [vmem:[#allocation2 + $0xf] sm:$0x1] %vm58, %v548
    %s550 = sadd.s32 %s513, 5
    %s551 = sld [smem:[#allocation3 + %s550]]
    %s552 = scalar_lea.vmem %s1, %s551
    %v553 = vld [vmem:[%s552] sm:$0x1]
    %555 = vrot.lane.b32.xlu0 %v553, 32
    %v556 = vpop.permute.xlu0 %555
    %558 = vst.msk [vmem:[#allocation2 + $0xf] sm:$0x1] %vm68, %v556
    %s559 = sadd.s32 %s513, 6
    %s560 = sld [smem:[#allocation3 + %s559]]
    %s561 = scalar_lea.vmem %s1, %s560
    %v562 = vld [vmem:[%s561] sm:$0x1]
    %564 = vrot.lane.b32.xlu0 %v562, 64
    %v565 = vpop.permute.xlu0 %564
    %567 = vst.msk [vmem:[#allocation2 + $0xf] sm:$0x1] %vm78, %v565
    %s568 = sadd.s32 %s513, 7
    %s569 = sld [smem:[#allocation3 + %s568]]
    %s570 = scalar_lea.vmem %s1, %s569
    %v571 = vld [vmem:[%s570] sm:$0x1]
    %573 = vrot.lane.b32.xlu0 %v571, 96
    %v574 = vpop.permute.xlu0 %573
    %576 = vst.msk [vmem:[#allocation2 + $0xf] sm:$0x1] %vm88, %v574
    %v577 = vld [vmem:[#allocation2] sm:$0xff]
    %v578 = vld [vmem:[#allocation2 + $0x8] sm:$0xff]
    %v579 = vpack.c.bf16 %v577, %v577
    %v580 = vpack.c.bf16 %v578, %v578
    %v581 = vld [vmem:[#allocation7] sm:$0xf]
    %v582 = vld [vmem:[#allocation7 + $0x4] sm:$0xf]
    %v583 = vld [vmem:[#allocation7 + $0x8] sm:$0xf]
    %v584 = vld [vmem:[#allocation7 + $0xc] sm:$0xf]
    %v585 = vld [vmem:[#allocation7 + $0x10] sm:$0xf]
    %v586 = vld [vmem:[#allocation7 + $0x14] sm:$0xf]
    %v587 = vld [vmem:[#allocation7 + $0x18] sm:$0xf]
    %v588 = vld [vmem:[#allocation7 + $0x1c] sm:$0xf]
    %v589 = vld [vmem:[#allocation7 + $0x20] sm:$0xf]
    %v590 = vld [vmem:[#allocation7 + $0x24] sm:$0xf]
    %v591 = vld [vmem:[#allocation7 + $0x28] sm:$0xf]
    %v592 = vld [vmem:[#allocation7 + $0x2c] sm:$0xf]
    %v593 = vld [vmem:[#allocation7 + $0x30] sm:$0xf]
    %v594 = vld [vmem:[#allocation7 + $0x34] sm:$0xf]
    %v595 = vld [vmem:[#allocation7 + $0x38] sm:$0xf]
    %v596 = vld [vmem:[#allocation7 + $0x3c] sm:$0xf]
    %v597 = vld [vmem:[#allocation7 + $0x40] sm:$0xf]
    %v598 = vld [vmem:[#allocation7 + $0x44] sm:$0xf]
    %v599 = vld [vmem:[#allocation7 + $0x48] sm:$0xf]
    %v600 = vld [vmem:[#allocation7 + $0x4c] sm:$0xf]
    %v601 = vld [vmem:[#allocation7 + $0x50] sm:$0xf]
    %v602 = vld [vmem:[#allocation7 + $0x54] sm:$0xf]
    %v603 = vld [vmem:[#allocation7 + $0x58] sm:$0xf]
    %v604 = vld [vmem:[#allocation7 + $0x5c] sm:$0xf]
    %v605 = vld [vmem:[#allocation7 + $0x60] sm:$0xf]
    %v606 = vld [vmem:[#allocation7 + $0x64] sm:$0xf]
    %v607 = vld [vmem:[#allocation7 + $0x68] sm:$0xf]
    %v608 = vld [vmem:[#allocation7 + $0x6c] sm:$0xf]
    %v609 = vld [vmem:[#allocation7 + $0x70] sm:$0xf]
    %v610 = vld [vmem:[#allocation7 + $0x74] sm:$0xf]
    %v611 = vld [vmem:[#allocation7 + $0x78] sm:$0xf]
    %v612 = vld [vmem:[#allocation7 + $0x7c] sm:$0xf]
    %v613 = vld [vmem:[%s3] sm:$0x1]
    %v615 = vperm.slane %v613, 0
    %v649 = vunpack.c.l.b16 %v581
    %v650 = vunpack.c.l.b16 %v582
    %v651 = vunpack.c.l.b16 %v583
    %v652 = vunpack.c.l.b16 %v584
    %v653 = vunpack.c.l.b16 %v585
    %v654 = vunpack.c.l.b16 %v586
    %v655 = vunpack.c.l.b16 %v587
    %v656 = vunpack.c.l.b16 %v588
    %v657 = vunpack.c.l.b16 %v589
    %v658 = vunpack.c.l.b16 %v590
    %v659 = vunpack.c.l.b16 %v591
    %v660 = vunpack.c.l.b16 %v592
    %v661 = vunpack.c.l.b16 %v593
    %v662 = vunpack.c.l.b16 %v594
    %v663 = vunpack.c.l.b16 %v595
    %v664 = vunpack.c.l.b16 %v596
    %v665 = vunpack.c.l.b16 %v597
    %v666 = vunpack.c.l.b16 %v598
    %v667 = vunpack.c.l.b16 %v599
    %v668 = vunpack.c.l.b16 %v600
    %v669 = vunpack.c.l.b16 %v601
    %v670 = vunpack.c.l.b16 %v602
    %v671 = vunpack.c.l.b16 %v603
    %v672 = vunpack.c.l.b16 %v604
    %v673 = vunpack.c.l.b16 %v605
    %v674 = vunpack.c.l.b16 %v606
    %v675 = vunpack.c.l.b16 %v607
    %v676 = vunpack.c.l.b16 %v608
    %v677 = vunpack.c.l.b16 %v609
    %v678 = vunpack.c.l.b16 %v610
    %v679 = vunpack.c.l.b16 %v611
    %v680 = vunpack.c.l.b16 %v612
    %v681 = vpack.c.b16 %v650, %v649
    %v682 = vpack.c.b16 %v652, %v651
    %v683 = vpack.c.b16 %v654, %v653
    %v684 = vpack.c.b16 %v656, %v655
    %v685 = vpack.c.b16 %v658, %v657
    %v686 = vpack.c.b16 %v660, %v659
    %v687 = vpack.c.b16 %v662, %v661
    %v688 = vpack.c.b16 %v664, %v663
    %v689 = vpack.c.b16 %v666, %v665
    %v690 = vpack.c.b16 %v668, %v667
    %v691 = vpack.c.b16 %v670, %v669
    %v692 = vpack.c.b16 %v672, %v671
    %v693 = vpack.c.b16 %v674, %v673
    %v694 = vpack.c.b16 %v676, %v675
    %v695 = vpack.c.b16 %v678, %v677
    %v696 = vpack.c.b16 %v680, %v679
    %713 = vmatpush.bf16.msra.mxu0 %v688
    %714 = vmatpush.bf16.msra.mxu0 %v687
    %715 = vmatpush.bf16.msra.mxu0 %v686
    %716 = vmatpush.bf16.msra.mxu0 %v685
    %717 = vmatpush.bf16.msra.mxu0 %v684
    %718 = vmatpush.bf16.msra.mxu0 %v683
    %719 = vmatpush.bf16.msra.mxu0 %v682
    %720 = vmatpush.bf16.msra.mxu0 %v681
    %721 = vmatmul.bf16.gmra.mxu0 %v579
    %v722 = vpop.f32.mrf.mxu0
    %v723 = vadd.f32 %v615, %v722
    %v724 = vpop.f32.mrf.mxu0
    %725 = vdwg.mxu0
    %726 = vmatpush.bf16.msra.mxu0 %v696
    %727 = vmatpush.bf16.msra.mxu0 %v695
    %728 = vmatpush.bf16.msra.mxu0 %v694
    %729 = vmatpush.bf16.msra.mxu0 %v693
    %730 = vmatpush.bf16.msra.mxu0 %v692
    %731 = vmatpush.bf16.msra.mxu0 %v691
    %732 = vmatpush.bf16.msra.mxu0 %v690
    %733 = vmatpush.bf16.msra.mxu0 %v689
    %734 = vmatmul.bf16.gmra.mxu0 %v580
    %v735 = vpop.f32.mrf.mxu0
    %v736 = vadd.f32 %v723, %v735
    %v737 = vpop.f32.mrf.mxu0
    %738 = vdwg.mxu0
    %v739 = vxor.u32 %v736, 2147483648
    %v740 = vmul.f32 %v739, 1.442695
    %v741 = vpow.pop %v740
    %v742 = vadd.f32 %v741, 1.0
    %v743 = vrcp.pop %v742
    %v744 = vmul.f32 %v742, %v743
    %v745 = vsub.f32 1.0, %v744
    %v746 = vmul.f32 %v743, %v745
    %v747 = vadd.f32 %v743, %v746
    %vm748 = vweird.f32 %v742
    %vm749 = vweird.f32 %v743
    %vm750 = vmor %vm748, %vm749
    %v751 = vsel %vm750, %v743, %v747
    %v752 = vand.u32 2147483647, %v742
    %vm753 = vcmp.eq.f32.partialorder %v752, 8.507059e+37
    %v754 = vand.u32 %v742, 2147483648
    %v755 = vor.u32 1.1754944e-38, %v754
    %v756 = vsel %vm753, %v755, %v751
    %v757 = vmul.f32 1.0, %v756
    %v758 = vpack.c.bf16 %v757, %v757
    %v759 = vld [vmem:[%s4] sm:$0xf]
    %v760 = vld [vmem:[%s4 + $0x4] sm:$0xf]
    %v761 = vld [vmem:[%s4 + $0x8] sm:$0xf]
    %v762 = vld [vmem:[%s4 + $0xc] sm:$0xf]
    %v763 = vld [vmem:[%s4 + $0x10] sm:$0xf]
    %v764 = vld [vmem:[%s4 + $0x14] sm:$0xf]
    %v765 = vld [vmem:[%s4 + $0x18] sm:$0xf]
    %v766 = vld [vmem:[%s4 + $0x1c] sm:$0xf]
    %v767 = vld [vmem:[%s4 + $0x20] sm:$0xf]
    %v768 = vld [vmem:[%s4 + $0x24] sm:$0xf]
    %v769 = vld [vmem:[%s4 + $0x28] sm:$0xf]
    %v770 = vld [vmem:[%s4 + $0x2c] sm:$0xf]
    %v771 = vld [vmem:[%s4 + $0x30] sm:$0xf]
    %v772 = vld [vmem:[%s4 + $0x34] sm:$0xf]
    %v773 = vld [vmem:[%s4 + $0x38] sm:$0xf]
    %v774 = vld [vmem:[%s4 + $0x3c] sm:$0xf]
    %v775 = vld [vmem:[%s5] sm:$0x1]
    %v777 = vperm.slane %v775, 0
    %v795 = vunpack.c.l.b16 %v759
    %v796 = vunpack.c.l.b16 %v760
    %v797 = vunpack.c.l.b16 %v761
    %v798 = vunpack.c.l.b16 %v762
    %v799 = vunpack.c.l.b16 %v763
    %v800 = vunpack.c.l.b16 %v764
    %v801 = vunpack.c.l.b16 %v765
    %v802 = vunpack.c.l.b16 %v766
    %v803 = vunpack.c.l.b16 %v767
    %v804 = vunpack.c.l.b16 %v768
    %v805 = vunpack.c.l.b16 %v769
    %v806 = vunpack.c.l.b16 %v770
    %v807 = vunpack.c.l.b16 %v771
    %v808 = vunpack.c.l.b16 %v772
    %v809 = vunpack.c.l.b16 %v773
    %v810 = vunpack.c.l.b16 %v774
    %v811 = vpack.c.b16 %v796, %v795
    %v812 = vpack.c.b16 %v798, %v797
    %v813 = vpack.c.b16 %v800, %v799
    %v814 = vpack.c.b16 %v802, %v801
    %v815 = vpack.c.b16 %v804, %v803
    %v816 = vpack.c.b16 %v806, %v805
    %v817 = vpack.c.b16 %v808, %v807
    %v818 = vpack.c.b16 %v810, %v809
    %827 = vmatpush.bf16.msra.mxu0 %v818
    %828 = vmatpush.bf16.msra.mxu0 %v817
    %829 = vmatpush.bf16.msra.mxu0 %v816
    %830 = vmatpush.bf16.msra.mxu0 %v815
    %831 = vmatpush.bf16.msra.mxu0 %v814
    %832 = vmatpush.bf16.msra.mxu0 %v813
    %833 = vmatpush.bf16.msra.mxu0 %v812
    %834 = vmatpush.bf16.msra.mxu0 %v811
    %835 = vmatmul.bf16.gmra.mxu0 %v758
    %v836 = vpop.f32.mrf.mxu0
    %v837 = vadd.f32 %v777, %v836
    %v838 = vpop.f32.mrf.mxu0
    %839 = vdwg.mxu0
    %840 = vst [vmem:[#allocation8] sm:$0xff] %v837
    // Predicated region
    $region34: #{tpu_custom_call.1} parent=1 // pred_check
      _
    $region35: #{tpu_custom_call.1} parent=1 // pred_check_branch
      %842 = sbr.rel (0) target = $region37
    $region36: #{tpu_custom_call.1} parent=1 // pred_region
      %844 = vsyncadd [#allocation5], 0
      %s846 = sshll.u32 [#allocation8], 4
      %s847 = int_to_ptr.vmem [resolvable:$true] %s846
      %s848 = sshll.u32 %s6, 4
      %s849 = int_to_ptr.hbm [resolvable:$true] %s848
      %851 = dma.vmem_to_hbm [thread:$0]  %s847, 128, %s849, [#allocation5]
    $region37: #{tpu_custom_call.1} parent=1 // pred_fallthru
      _
    // Predicated region
    $region38: #{tpu_custom_call.1} parent=1 // pred_check
      _
    $region39: #{tpu_custom_call.1} parent=1 // pred_check_branch
      %853 = sbr.rel (0) target = $region41
    $region40: #{tpu_custom_call.1} parent=1 // pred_region
      %855 = dma.done [#allocation5], 128
    $region41: #{tpu_custom_call.1} parent=1 // pred_fallthru
      _
    %856 = vsyncpa [#allocation4], 1
    %857 = vsyncpa [#allocation5], 1
    %858 = vsyncpa [#allocation6], 1

</llo_original>
